<compile_context>
chip_gen: v5e
topology: v5e:2x2
jax: 0.10.0
libtpu: 0.0.40
codegen_flags: <defaults>
</compile_context>

<pallas_src>
import jax
import jax.numpy as jnp
from jax import lax
from jax.experimental import pallas as pl
from jax.experimental.pallas import tpu as pltpu

# ---------------- configuration (small, consistent with the module) ----------------
B = 2            # batch
S = 16           # sequence length
E = 32           # embed_dim
H = 4            # num_heads  (E % H == 0)
HD = E // H      # head_dim
FFN = 64         # ffn_latent_dim
M = B * S        # folded rows (batch folded into matmul M-dim)
SCALING = HD ** -0.5
LN_EPS = 1e-5    # nn.LayerNorm default
NEG_INF = -1e30


def _layer_norm(x, gamma, beta):
    # Single-pass LayerNorm: mean and mean-of-squares computed together.
    mu = jnp.mean(x, axis=-1, keepdims=True)
    ms = jnp.mean(x * x, axis=-1, keepdims=True)
    var = ms - mu * mu
    return (x - mu) * lax.rsqrt(var + LN_EPS) * gamma + beta


def transformer_encoder_kernel(
    x_ref,        # (M, E)
    wqkv_ref,     # (E, 3E)  -- scaling folded into the Q columns
    wout_ref,     # (E, E)
    w1_ref,       # (E, FFN)
    w2_ref,       # (FFN, E)
    vec_ref,      # (8, 3E)  packed biases / LN params
    bias_ref,     # (M, M)   additive block-diagonal attention bias (0 / -1e30)
    o_ref,        # (M, E)
):
    x = x_ref[...]                                           # (M, E)

    # Unpack the bias/LN slab (all slices start at lane 0 -> no lane rotates).
    ln1_g = vec_ref[0:1, 0:E]
    ln1_b = vec_ref[1:2, 0:E]
    b_qkv = vec_ref[2:3, 0:3 * E]
    b_out = vec_ref[3:4, 0:E]
    ln2_g = vec_ref[4:5, 0:E]
    ln2_b = vec_ref[5:6, 0:E]
    b_fc1 = vec_ref[6:7, 0:FFN]
    b_fc2 = vec_ref[7:8, 0:E]

    # ---------------- pre_norm_mha: LayerNorm -> MHA -> Dropout(0) ----------------
    xn = _layer_norm(x, ln1_g, ln1_b)                        # (M, E)

    # Fused QKV projection: one MXU push.  (Q columns/bias already carry 1/sqrt(HD).)
    qkv = jnp.dot(xn, wqkv_ref[...], preferred_element_type=jnp.float32) + b_qkv  # (M, 3E)

    attn_bias = bias_ref[...]                                # (M, M), block-diagonal over batch

    ctx_heads = []
    for h in range(H):                                       # unrolled, H = 4
        lo = h * HD
        q_h = qkv[:, lo:lo + HD]                             # (M, HD), pre-scaled
        k_h = qkv[:, E + lo:E + lo + HD]                     # (M, HD)
        v_h = qkv[:, 2 * E + lo:2 * E + lo + HD]             # (M, HD)

        # Scores: contract last dim of both operands (no explicit K transpose).
        s = lax.dot_general(q_h, k_h, (((1,), (1,)), ((), ())),
                            preferred_element_type=jnp.float32)      # (M, M)
        s = s + attn_bias
        s = s - jnp.max(s, axis=-1, keepdims=True)
        p = jnp.exp(s)
        p = p / jnp.sum(p, axis=-1, keepdims=True)           # exact divide (attn_dropout p=0)

        ctx_heads.append(jnp.dot(p, v_h, preferred_element_type=jnp.float32))  # (M, HD)

    ctx = jnp.concatenate(ctx_heads, axis=-1)                # (M, E), head order == torch concat

    # Fused out_proj: single (M, E) @ (E, E) push.
    mha = jnp.dot(ctx, wout_ref[...], preferred_element_type=jnp.float32) + b_out
    x1 = x + mha                                             # residual (dropout p=0)

    # ---------------- pre_norm_ffn: LayerNorm -> Linear -> SiLU -> Linear ----------------
    x1n = _layer_norm(x1, ln2_g, ln2_b)
    h1 = jnp.dot(x1n, w1_ref[...], preferred_element_type=jnp.float32) + b_fc1   # (M, FFN)
    h1 = h1 * jax.nn.sigmoid(h1)                             # SiLU
    h2 = jnp.dot(h1, w2_ref[...], preferred_element_type=jnp.float32) + b_fc2    # (M, E)

    o_ref[...] = x1 + h2                                     # residual (dropout p=0)


def pack_params(params):
    """One-time relayout of torch-layout weights into packed, lane-dense kernel operands."""
    # Fused QKV weight (E, 3E) with attention scaling folded into the Q columns.
    w_qkv = params["qkv_w"].T                                        # (E, 3E)
    w_qkv = w_qkv.at[:, :E].multiply(SCALING)

    w_out = params["out_w"].T                                        # (E, E)
    w1 = params["fc1_w"].T                                           # (E, FFN)
    w2 = params["fc2_w"].T                                           # (FFN, E)

    # Pack all vectors into one (8, 3E) slab.
    qkv_b = params["qkv_b"].reshape(3 * E)
    qkv_b = qkv_b.at[:E].multiply(SCALING)                           # fold scaling into Q bias
    vecs = jnp.zeros((8, 3 * E), jnp.float32)
    vecs = vecs.at[0, :E].set(params["ln1_g"].reshape(E))
    vecs = vecs.at[1, :E].set(params["ln1_b"].reshape(E))
    vecs = vecs.at[2, :].set(qkv_b)
    vecs = vecs.at[3, :E].set(params["out_b"].reshape(E))
    vecs = vecs.at[4, :E].set(params["ln2_g"].reshape(E))
    vecs = vecs.at[5, :E].set(params["ln2_b"].reshape(E))
    vecs = vecs.at[6, :FFN].set(params["fc1_b"].reshape(FFN))
    vecs = vecs.at[7, :E].set(params["fc2_b"].reshape(E))

    # Precomputed block-diagonal additive attention bias over the folded batch.
    rb = jnp.arange(M, dtype=jnp.int32) // S
    attn_bias = jnp.where(rb[:, None] == rb[None, :], 0.0, NEG_INF).astype(jnp.float32)

    return {"w_qkv": w_qkv, "w_out": w_out, "w1": w1, "w2": w2,
            "vecs": vecs, "attn_bias": attn_bias}


@jax.jit
def transformer_encoder_packed(x, packed):
    """x: (B, S, E) float32, packed: output of pack_params (precomputed once)."""
    x2d = x.reshape(M, E)
    vmem = pl.BlockSpec(memory_space=pltpu.MemorySpace.VMEM)
    y2d = pl.pallas_call(
        transformer_encoder_kernel,
        out_shape=jax.ShapeDtypeStruct((M, E), jnp.float32),
        in_specs=[vmem] * 7,
        out_specs=vmem,
    )(x2d, packed["w_qkv"], packed["w_out"], packed["w1"], packed["w2"],
      packed["vecs"], packed["attn_bias"])
    return y2d.reshape(B, S, E)


def transformer_encoder(x, params):
    """Convenience entry point (packs every call); prefer pack_params once + the jitted fn."""
    return transformer_encoder_packed(x, pack_params(params))


def reference(x, p):
    """Pure-JAX reference mirroring the PyTorch forward exactly."""
    def ln(v, g, b):
        mu = jnp.mean(v, -1, keepdims=True)
        var = jnp.mean((v - mu) ** 2, -1, keepdims=True)
        return (v - mu) / jnp.sqrt(var + LN_EPS) * g + b

    xn = ln(x, p["ln1_g"], p["ln1_b"])
    qkv = xn @ p["qkv_w"].T + p["qkv_b"]                              # (B, S, 3E)
    qkv = qkv.reshape(B, S, 3, H, HD).transpose(0, 3, 2, 1, 4)        # (B, H, 3, S, HD)
    q, k, v = qkv[:, :, 0], qkv[:, :, 1], qkv[:, :, 2]
    attn = jax.nn.softmax(jnp.einsum("bhqd,bhkd->bhqk", q * SCALING, k), axis=-1)
    out = jnp.einsum("bhqk,bhkd->bhqd", attn, v)
    out = out.transpose(0, 2, 1, 3).reshape(B, S, E)
    out = out @ p["out_w"].T + p["out_b"]
    x1 = x + out
    x1n = ln(x1, p["ln2_g"], p["ln2_b"])
    h1 = x1n @ p["fc1_w"].T + p["fc1_b"]
    h1 = h1 * jax.nn.sigmoid(h1)
    h2 = h1 @ p["fc2_w"].T + p["fc2_b"]
    return x1 + h2


if __name__ == "__main__":
    key = jax.random.PRNGKey(0)
    ks = jax.random.split(key, 8)

    x = jax.random.normal(ks[0], (B, S, E), dtype=jnp.float32)

    params = {
        "ln1_g": jnp.ones((1, E), jnp.float32),
        "ln1_b": jnp.zeros((1, E), jnp.float32),
        "qkv_w": 0.05 * jax.random.normal(ks[1], (3 * E, E), dtype=jnp.float32),
        "qkv_b": 0.01 * jax.random.normal(ks[2], (1, 3 * E), dtype=jnp.float32),
        "out_w": 0.05 * jax.random.normal(ks[3], (E, E), dtype=jnp.float32),
        "out_b": 0.01 * jax.random.normal(ks[4], (1, E), dtype=jnp.float32),
        "ln2_g": jnp.ones((1, E), jnp.float32),
        "ln2_b": jnp.zeros((1, E), jnp.float32),
        "fc1_w": 0.05 * jax.random.normal(ks[5], (FFN, E), dtype=jnp.float32),
        "fc1_b": 0.01 * jax.random.normal(ks[6], (1, FFN), dtype=jnp.float32),
        "fc2_w": 0.05 * jax.random.normal(ks[7], (E, FFN), dtype=jnp.float32),
        "fc2_b": jnp.zeros((1, E), jnp.float32),
    }

    # One-time weight relayout, hoisted out of the per-call path.
    packed = jax.tree_util.tree_map(jax.block_until_ready, pack_params(params))

    y = transformer_encoder_packed(x, packed)
    y = jax.block_until_ready(y)

    y_ref = reference(x, params)
    assert y.shape == (B, S, E)
    assert jnp.allclose(y, y_ref, rtol=1e-3, atol=1e-3), "mismatch vs reference"

    print("KERNEL_OK")
</pallas_src>

<mosaic_0001>
module attributes {stable_mosaic.version = 11 : i64} {
  func.func @transformer_encoder_kernel(%arg0: memref<32x32xf32, #tpu.memory_space<vmem>>, %arg1: memref<32x96xf32, #tpu.memory_space<vmem>>, %arg2: memref<32x32xf32, #tpu.memory_space<vmem>>, %arg3: memref<32x64xf32, #tpu.memory_space<vmem>>, %arg4: memref<64x32xf32, #tpu.memory_space<vmem>>, %arg5: memref<8x96xf32, #tpu.memory_space<vmem>>, %arg6: memref<32x32xf32, #tpu.memory_space<vmem>>, %arg7: memref<32x32xf32, #tpu.memory_space<vmem>>) attributes {dimension_semantics = [], scalar_prefetch = 0 : i64, scratch_operands = 0 : i64, tpu.core_type = #tpu.core_type<tc>} {
    %c0 = arith.constant 0 : index
    %c0_0 = arith.constant 0 : index
    %0 = vector.load %arg0[%c0, %c0_0] : memref<32x32xf32, #tpu.memory_space<vmem>>, vector<32x32xf32>
    %c0_1 = arith.constant 0 : index
    %c0_2 = arith.constant 0 : index
    %1 = vector.load %arg5[%c0_1, %c0_2] : memref<8x96xf32, #tpu.memory_space<vmem>>, vector<1x32xf32>
    %c1 = arith.constant 1 : index
    %c0_3 = arith.constant 0 : index
    %2 = vector.load %arg5[%c1, %c0_3] : memref<8x96xf32, #tpu.memory_space<vmem>>, vector<1x32xf32>
    %c2 = arith.constant 2 : index
    %c0_4 = arith.constant 0 : index
    %3 = vector.load %arg5[%c2, %c0_4] : memref<8x96xf32, #tpu.memory_space<vmem>>, vector<1x96xf32>
    %c3 = arith.constant 3 : index
    %c0_5 = arith.constant 0 : index
    %4 = vector.load %arg5[%c3, %c0_5] : memref<8x96xf32, #tpu.memory_space<vmem>>, vector<1x32xf32>
    %c4 = arith.constant 4 : index
    %c0_6 = arith.constant 0 : index
    %5 = vector.load %arg5[%c4, %c0_6] : memref<8x96xf32, #tpu.memory_space<vmem>>, vector<1x32xf32>
    %c5 = arith.constant 5 : index
    %c0_7 = arith.constant 0 : index
    %6 = vector.load %arg5[%c5, %c0_7] : memref<8x96xf32, #tpu.memory_space<vmem>>, vector<1x32xf32>
    %c6 = arith.constant 6 : index
    %c0_8 = arith.constant 0 : index
    %7 = vector.load %arg5[%c6, %c0_8] : memref<8x96xf32, #tpu.memory_space<vmem>>, vector<1x64xf32>
    %c7 = arith.constant 7 : index
    %c0_9 = arith.constant 0 : index
    %8 = vector.load %arg5[%c7, %c0_9] : memref<8x96xf32, #tpu.memory_space<vmem>>, vector<1x32xf32>
    %cst = arith.constant dense<0.000000e+00> : vector<32xf32>
    %9 = vector.multi_reduction <add>, %0, %cst [1] : vector<32x32xf32> to vector<32xf32>
    %10 = vector.shape_cast %9 : vector<32xf32> to vector<32x1xf32>
    %cst_10 = arith.constant 3.200000e+01 : f32
    %11 = vector.broadcast %cst_10 : f32 to vector<32x1xf32>
    %12 = arith.divf %10, %11 : vector<32x1xf32>
    %13 = arith.mulf %0, %0 : vector<32x32xf32>
    %cst_11 = arith.constant dense<0.000000e+00> : vector<32xf32>
    %14 = vector.multi_reduction <add>, %13, %cst_11 [1] : vector<32x32xf32> to vector<32xf32>
    %15 = vector.shape_cast %14 : vector<32xf32> to vector<32x1xf32>
    %cst_12 = arith.constant 3.200000e+01 : f32
    %16 = vector.broadcast %cst_12 : f32 to vector<32x1xf32>
    %17 = arith.divf %15, %16 : vector<32x1xf32>
    %18 = arith.mulf %12, %12 : vector<32x1xf32>
    %19 = arith.subf %17, %18 : vector<32x1xf32>
    %20 = vector.broadcast %12 : vector<32x1xf32> to vector<32x32xf32>
    %21 = arith.subf %0, %20 : vector<32x32xf32>
    %cst_13 = arith.constant 9.99999974E-6 : f32
    %22 = vector.broadcast %cst_13 : f32 to vector<32x1xf32>
    %23 = arith.addf %19, %22 : vector<32x1xf32>
    %24 = math.rsqrt %23 : vector<32x1xf32>
    %25 = vector.broadcast %24 : vector<32x1xf32> to vector<32x32xf32>
    %26 = arith.mulf %21, %25 : vector<32x32xf32>
    %27 = vector.broadcast %1 : vector<1x32xf32> to vector<32x32xf32>
    %28 = arith.mulf %26, %27 : vector<32x32xf32>
    %29 = vector.broadcast %2 : vector<1x32xf32> to vector<32x32xf32>
    %30 = arith.addf %28, %29 : vector<32x32xf32>
    %c0_14 = arith.constant 0 : index
    %c0_15 = arith.constant 0 : index
    %31 = vector.load %arg1[%c0_14, %c0_15] : memref<32x96xf32, #tpu.memory_space<vmem>>, vector<32x96xf32>
    %cst_16 = arith.constant dense<0.000000e+00> : vector<32x96xf32>
    %32 = tpu.matmul %30, %31, %cst_16 {dimension_numbers = #tpu.dot_dimension_numbers<[1], [0], [0], [1], [0, 0, 1, 1], [], []>} : vector<32x32xf32>, vector<32x96xf32>, vector<32x96xf32> -> vector<32x96xf32>
    %33 = vector.broadcast %3 : vector<1x96xf32> to vector<32x96xf32>
    %34 = arith.addf %32, %33 : vector<32x96xf32>
    %c0_17 = arith.constant 0 : index
    %c0_18 = arith.constant 0 : index
    %35 = vector.load %arg6[%c0_17, %c0_18] : memref<32x32xf32, #tpu.memory_space<vmem>>, vector<32x32xf32>
    %36 = vector.extract_strided_slice %34 {offsets = [0, 0], sizes = [32, 8], strides = [1, 1]} : vector<32x96xf32> to vector<32x8xf32>
    %37 = vector.extract_strided_slice %34 {offsets = [0, 32], sizes = [32, 8], strides = [1, 1]} : vector<32x96xf32> to vector<32x8xf32>
    %38 = vector.extract_strided_slice %34 {offsets = [0, 64], sizes = [32, 8], strides = [1, 1]} : vector<32x96xf32> to vector<32x8xf32>
    %cst_19 = arith.constant dense<0.000000e+00> : vector<32x32xf32>
    %39 = tpu.matmul %36, %37, %cst_19 {dimension_numbers = #tpu.dot_dimension_numbers<[1], [1], [0], [0], [0, 0, 1, 0], [], []>} : vector<32x8xf32>, vector<32x8xf32>, vector<32x32xf32> -> vector<32x32xf32>
    %40 = arith.addf %39, %35 : vector<32x32xf32>
    %cst_20 = arith.constant dense<0xFF800000> : vector<32xf32>
    %41 = vector.multi_reduction <maximumf>, %40, %cst_20 [1] : vector<32x32xf32> to vector<32xf32>
    %42 = vector.shape_cast %41 : vector<32xf32> to vector<32x1xf32>
    %43 = vector.broadcast %42 : vector<32x1xf32> to vector<32x32xf32>
    %44 = arith.subf %40, %43 : vector<32x32xf32>
    %45 = math.exp %44 : vector<32x32xf32>
    %cst_21 = arith.constant dense<0.000000e+00> : vector<32xf32>
    %46 = vector.multi_reduction <add>, %45, %cst_21 [1] : vector<32x32xf32> to vector<32xf32>
    %47 = vector.shape_cast %46 : vector<32xf32> to vector<32x1xf32>
    %48 = vector.broadcast %47 : vector<32x1xf32> to vector<32x32xf32>
    %49 = arith.divf %45, %48 : vector<32x32xf32>
    %cst_22 = arith.constant dense<0.000000e+00> : vector<32x8xf32>
    %50 = tpu.matmul %49, %38, %cst_22 {dimension_numbers = #tpu.dot_dimension_numbers<[1], [0], [0], [1], [0, 0, 1, 1], [], []>} : vector<32x32xf32>, vector<32x8xf32>, vector<32x8xf32> -> vector<32x8xf32>
    %51 = vector.extract_strided_slice %34 {offsets = [0, 8], sizes = [32, 8], strides = [1, 1]} : vector<32x96xf32> to vector<32x8xf32>
    %52 = vector.extract_strided_slice %34 {offsets = [0, 40], sizes = [32, 8], strides = [1, 1]} : vector<32x96xf32> to vector<32x8xf32>
    %53 = vector.extract_strided_slice %34 {offsets = [0, 72], sizes = [32, 8], strides = [1, 1]} : vector<32x96xf32> to vector<32x8xf32>
    %cst_23 = arith.constant dense<0.000000e+00> : vector<32x32xf32>
    %54 = tpu.matmul %51, %52, %cst_23 {dimension_numbers = #tpu.dot_dimension_numbers<[1], [1], [0], [0], [0, 0, 1, 0], [], []>} : vector<32x8xf32>, vector<32x8xf32>, vector<32x32xf32> -> vector<32x32xf32>
    %55 = arith.addf %54, %35 : vector<32x32xf32>
    %cst_24 = arith.constant dense<0xFF800000> : vector<32xf32>
    %56 = vector.multi_reduction <maximumf>, %55, %cst_24 [1] : vector<32x32xf32> to vector<32xf32>
    %57 = vector.shape_cast %56 : vector<32xf32> to vector<32x1xf32>
    %58 = vector.broadcast %57 : vector<32x1xf32> to vector<32x32xf32>
    %59 = arith.subf %55, %58 : vector<32x32xf32>
    %60 = math.exp %59 : vector<32x32xf32>
    %cst_25 = arith.constant dense<0.000000e+00> : vector<32xf32>
    %61 = vector.multi_reduction <add>, %60, %cst_25 [1] : vector<32x32xf32> to vector<32xf32>
    %62 = vector.shape_cast %61 : vector<32xf32> to vector<32x1xf32>
    %63 = vector.broadcast %62 : vector<32x1xf32> to vector<32x32xf32>
    %64 = arith.divf %60, %63 : vector<32x32xf32>
    %cst_26 = arith.constant dense<0.000000e+00> : vector<32x8xf32>
    %65 = tpu.matmul %64, %53, %cst_26 {dimension_numbers = #tpu.dot_dimension_numbers<[1], [0], [0], [1], [0, 0, 1, 1], [], []>} : vector<32x32xf32>, vector<32x8xf32>, vector<32x8xf32> -> vector<32x8xf32>
    %66 = vector.extract_strided_slice %34 {offsets = [0, 16], sizes = [32, 8], strides = [1, 1]} : vector<32x96xf32> to vector<32x8xf32>
    %67 = vector.extract_strided_slice %34 {offsets = [0, 48], sizes = [32, 8], strides = [1, 1]} : vector<32x96xf32> to vector<32x8xf32>
    %68 = vector.extract_strided_slice %34 {offsets = [0, 80], sizes = [32, 8], strides = [1, 1]} : vector<32x96xf32> to vector<32x8xf32>
    %cst_27 = arith.constant dense<0.000000e+00> : vector<32x32xf32>
    %69 = tpu.matmul %66, %67, %cst_27 {dimension_numbers = #tpu.dot_dimension_numbers<[1], [1], [0], [0], [0, 0, 1, 0], [], []>} : vector<32x8xf32>, vector<32x8xf32>, vector<32x32xf32> -> vector<32x32xf32>
    %70 = arith.addf %69, %35 : vector<32x32xf32>
    %cst_28 = arith.constant dense<0xFF800000> : vector<32xf32>
    %71 = vector.multi_reduction <maximumf>, %70, %cst_28 [1] : vector<32x32xf32> to vector<32xf32>
    %72 = vector.shape_cast %71 : vector<32xf32> to vector<32x1xf32>
    %73 = vector.broadcast %72 : vector<32x1xf32> to vector<32x32xf32>
    %74 = arith.subf %70, %73 : vector<32x32xf32>
    %75 = math.exp %74 : vector<32x32xf32>
    %cst_29 = arith.constant dense<0.000000e+00> : vector<32xf32>
    %76 = vector.multi_reduction <add>, %75, %cst_29 [1] : vector<32x32xf32> to vector<32xf32>
    %77 = vector.shape_cast %76 : vector<32xf32> to vector<32x1xf32>
    %78 = vector.broadcast %77 : vector<32x1xf32> to vector<32x32xf32>
    %79 = arith.divf %75, %78 : vector<32x32xf32>
    %cst_30 = arith.constant dense<0.000000e+00> : vector<32x8xf32>
    %80 = tpu.matmul %79, %68, %cst_30 {dimension_numbers = #tpu.dot_dimension_numbers<[1], [0], [0], [1], [0, 0, 1, 1], [], []>} : vector<32x32xf32>, vector<32x8xf32>, vector<32x8xf32> -> vector<32x8xf32>
    %81 = vector.extract_strided_slice %34 {offsets = [0, 24], sizes = [32, 8], strides = [1, 1]} : vector<32x96xf32> to vector<32x8xf32>
    %82 = vector.extract_strided_slice %34 {offsets = [0, 56], sizes = [32, 8], strides = [1, 1]} : vector<32x96xf32> to vector<32x8xf32>
    %83 = vector.extract_strided_slice %34 {offsets = [0, 88], sizes = [32, 8], strides = [1, 1]} : vector<32x96xf32> to vector<32x8xf32>
    %cst_31 = arith.constant dense<0.000000e+00> : vector<32x32xf32>
    %84 = tpu.matmul %81, %82, %cst_31 {dimension_numbers = #tpu.dot_dimension_numbers<[1], [1], [0], [0], [0, 0, 1, 0], [], []>} : vector<32x8xf32>, vector<32x8xf32>, vector<32x32xf32> -> vector<32x32xf32>
    %85 = arith.addf %84, %35 : vector<32x32xf32>
    %cst_32 = arith.constant dense<0xFF800000> : vector<32xf32>
    %86 = vector.multi_reduction <maximumf>, %85, %cst_32 [1] : vector<32x32xf32> to vector<32xf32>
    %87 = vector.shape_cast %86 : vector<32xf32> to vector<32x1xf32>
    %88 = vector.broadcast %87 : vector<32x1xf32> to vector<32x32xf32>
    %89 = arith.subf %85, %88 : vector<32x32xf32>
    %90 = math.exp %89 : vector<32x32xf32>
    %cst_33 = arith.constant dense<0.000000e+00> : vector<32xf32>
    %91 = vector.multi_reduction <add>, %90, %cst_33 [1] : vector<32x32xf32> to vector<32xf32>
    %92 = vector.shape_cast %91 : vector<32xf32> to vector<32x1xf32>
    %93 = vector.broadcast %92 : vector<32x1xf32> to vector<32x32xf32>
    %94 = arith.divf %90, %93 : vector<32x32xf32>
    %cst_34 = arith.constant dense<0.000000e+00> : vector<32x8xf32>
    %95 = tpu.matmul %94, %83, %cst_34 {dimension_numbers = #tpu.dot_dimension_numbers<[1], [0], [0], [1], [0, 0, 1, 1], [], []>} : vector<32x32xf32>, vector<32x8xf32>, vector<32x8xf32> -> vector<32x8xf32>
    %96 = tpu.concatenate %50, %65, %80, %95 in 1 : vector<32x8xf32>, vector<32x8xf32>, vector<32x8xf32>, vector<32x8xf32> -> vector<32x32xf32>
    %c0_35 = arith.constant 0 : index
    %c0_36 = arith.constant 0 : index
    %97 = vector.load %arg2[%c0_35, %c0_36] : memref<32x32xf32, #tpu.memory_space<vmem>>, vector<32x32xf32>
    %cst_37 = arith.constant dense<0.000000e+00> : vector<32x32xf32>
    %98 = tpu.matmul %96, %97, %cst_37 {dimension_numbers = #tpu.dot_dimension_numbers<[1], [0], [0], [1], [0, 0, 1, 1], [], []>} : vector<32x32xf32>, vector<32x32xf32>, vector<32x32xf32> -> vector<32x32xf32>
    %99 = vector.broadcast %4 : vector<1x32xf32> to vector<32x32xf32>
    %100 = arith.addf %98, %99 : vector<32x32xf32>
    %101 = arith.addf %0, %100 : vector<32x32xf32>
    %cst_38 = arith.constant dense<0.000000e+00> : vector<32xf32>
    %102 = vector.multi_reduction <add>, %101, %cst_38 [1] : vector<32x32xf32> to vector<32xf32>
    %103 = vector.shape_cast %102 : vector<32xf32> to vector<32x1xf32>
    %cst_39 = arith.constant 3.200000e+01 : f32
    %104 = vector.broadcast %cst_39 : f32 to vector<32x1xf32>
    %105 = arith.divf %103, %104 : vector<32x1xf32>
    %106 = arith.mulf %101, %101 : vector<32x32xf32>
    %cst_40 = arith.constant dense<0.000000e+00> : vector<32xf32>
    %107 = vector.multi_reduction <add>, %106, %cst_40 [1] : vector<32x32xf32> to vector<32xf32>
    %108 = vector.shape_cast %107 : vector<32xf32> to vector<32x1xf32>
    %cst_41 = arith.constant 3.200000e+01 : f32
    %109 = vector.broadcast %cst_41 : f32 to vector<32x1xf32>
    %110 = arith.divf %108, %109 : vector<32x1xf32>
    %111 = arith.mulf %105, %105 : vector<32x1xf32>
    %112 = arith.subf %110, %111 : vector<32x1xf32>
    %113 = vector.broadcast %105 : vector<32x1xf32> to vector<32x32xf32>
    %114 = arith.subf %101, %113 : vector<32x32xf32>
    %cst_42 = arith.constant 9.99999974E-6 : f32
    %115 = vector.broadcast %cst_42 : f32 to vector<32x1xf32>
    %116 = arith.addf %112, %115 : vector<32x1xf32>
    %117 = math.rsqrt %116 : vector<32x1xf32>
    %118 = vector.broadcast %117 : vector<32x1xf32> to vector<32x32xf32>
    %119 = arith.mulf %114, %118 : vector<32x32xf32>
    %120 = vector.broadcast %5 : vector<1x32xf32> to vector<32x32xf32>
    %121 = arith.mulf %119, %120 : vector<32x32xf32>
    %122 = vector.broadcast %6 : vector<1x32xf32> to vector<32x32xf32>
    %123 = arith.addf %121, %122 : vector<32x32xf32>
    %c0_43 = arith.constant 0 : index
    %c0_44 = arith.constant 0 : index
    %124 = vector.load %arg3[%c0_43, %c0_44] : memref<32x64xf32, #tpu.memory_space<vmem>>, vector<32x64xf32>
    %cst_45 = arith.constant dense<0.000000e+00> : vector<32x64xf32>
    %125 = tpu.matmul %123, %124, %cst_45 {dimension_numbers = #tpu.dot_dimension_numbers<[1], [0], [0], [1], [0, 0, 1, 1], [], []>} : vector<32x32xf32>, vector<32x64xf32>, vector<32x64xf32> -> vector<32x64xf32>
    %126 = vector.broadcast %7 : vector<1x64xf32> to vector<32x64xf32>
    %127 = arith.addf %125, %126 : vector<32x64xf32>
    %128 = arith.negf %127 : vector<32x64xf32>
    %129 = math.exp %128 : vector<32x64xf32>
    %cst_46 = arith.constant 1.000000e+00 : f32
    %130 = vector.broadcast %cst_46 : f32 to vector<32x64xf32>
    %131 = arith.addf %130, %129 : vector<32x64xf32>
    %132 = arith.divf %130, %131 : vector<32x64xf32>
    %133 = arith.mulf %127, %132 : vector<32x64xf32>
    %c0_47 = arith.constant 0 : index
    %c0_48 = arith.constant 0 : index
    %134 = vector.load %arg4[%c0_47, %c0_48] : memref<64x32xf32, #tpu.memory_space<vmem>>, vector<64x32xf32>
    %cst_49 = arith.constant dense<0.000000e+00> : vector<32x32xf32>
    %135 = tpu.matmul %133, %134, %cst_49 {dimension_numbers = #tpu.dot_dimension_numbers<[1], [0], [0], [1], [0, 0, 1, 1], [], []>} : vector<32x64xf32>, vector<64x32xf32>, vector<32x32xf32> -> vector<32x32xf32>
    %136 = vector.broadcast %8 : vector<1x32xf32> to vector<32x32xf32>
    %137 = arith.addf %135, %136 : vector<32x32xf32>
    %138 = arith.addf %101, %137 : vector<32x32xf32>
    %c0_50 = arith.constant 0 : index
    %c0_51 = arith.constant 0 : index
    %139 = vector.load %arg7[%c0_50, %c0_51] : memref<32x32xf32, #tpu.memory_space<vmem>>, vector<32x32xf32>
    tpu.vector_store %arg7[%c0_50, %c0_51], %138 {strides = array<i32>} : memref<32x32xf32, #tpu.memory_space<vmem>>, vector<32x32xf32>,
    return
  }
}

</mosaic_0001>

<llo_original>
// kernel: transformer_encoder_packed.1
$region0: #{transformer_encoder_packed.1}
  #allocation0 [shape = 'u32[]', space=smem, size = 0x4, offset = 0x4, fixed_abs, tag = 'smem constant byte address 0x4 - core index']
  #allocation1 [shape = 'u32[72,128]{1,0:T(1,128)}', space=vmem, size = 0x9000, scoped, tag = 'internal scratch']
  %s0 = inlined_call_operand.vmem [shape: f32[32,32], index: 0, kind: input, shape index: {}]
  %s1 = inlined_call_operand.vmem [shape: f32[32,96], index: 1, kind: input, shape index: {}]
  %s2 = inlined_call_operand.vmem [shape: f32[32,32], index: 2, kind: input, shape index: {}]
  %s3 = inlined_call_operand.hbm [shape: f32[32,64], index: 3, kind: input, shape index: {}]
  %s4 = inlined_call_operand.vmem [shape: f32[64,32], index: 4, kind: input, shape index: {}]
  %s5 = inlined_call_operand.hbm [shape: f32[8,96], index: 5, kind: input, shape index: {}]
  %s6 = inlined_call_operand.hbm [shape: f32[32,32], index: 6, kind: input, shape index: {}]
  %s7 = inlined_call_operand.hbm [shape: f32[32,32], index: 7, kind: output, shape index: {}]
  %s8 = sld [smem:[#allocation0]]
  $region50: #{transformer_encoder_packed.1} parent=0
    _
  %s10 = ssub.s32 1, %s8
  %s11 = scalar_select 0, %s10, %s8
  $region1: #{transformer_encoder_packed.1} parent=0
    #allocation2 [shape = 'u8[16384]{0}', space=vmem, size = 0x4000, scoped, tag = 'input window, operand 3, single buffered']
    #allocation3 [shape = 's32[1]{0}', space=sflag, size = 0x4, scoped, tag = 'scoped memory for transformer_encoder_packed.1']
    #allocation4 [shape = 's32[1]{0}', space=sflag, size = 0x4, scoped, tag = 'scoped memory for transformer_encoder_packed.1']
    #allocation5 [shape = 'u8[4096]{0}', space=vmem, size = 0x1000, scoped, tag = 'input window, operand 5, single buffered']
    #allocation6 [shape = 's32[1]{0}', space=sflag, size = 0x4, scoped, tag = 'scoped memory for transformer_encoder_packed.1']
    #allocation7 [shape = 'u8[16384]{0}', space=vmem, size = 0x4000, scoped, tag = 'input window, operand 6, single buffered']
    #allocation8 [shape = 'u8[16384]{0}', space=vmem, size = 0x4000, scoped, tag = 'output window, operand 0, single buffered']
    %12 = vsyncpa [#allocation3], 0
    %13 = vsyncpa [#allocation6], 0
    %14 = vsyncpa [#allocation4], 0
    // Predicated region
    $region2: #{transformer_encoder_packed.1} parent=1 // pred_check
      _
    $region3: #{transformer_encoder_packed.1} parent=1 // pred_check_branch
      %16 = sbr.rel (0) target = $region5
    $region4: #{transformer_encoder_packed.1} parent=1 // pred_region
      _
    $region5: #{transformer_encoder_packed.1} parent=1 // pred_fallthru
      _
    // Predicated region
    $region6: #{transformer_encoder_packed.1} parent=1 // pred_check
      _
    $region7: #{transformer_encoder_packed.1} parent=1 // pred_check_branch
      %18 = sbr.rel (0) target = $region9
    $region8: #{transformer_encoder_packed.1} parent=1 // pred_region
      _
    $region9: #{transformer_encoder_packed.1} parent=1 // pred_fallthru
      _
    // Predicated region
    $region10: #{transformer_encoder_packed.1} parent=1 // pred_check
      _
    $region11: #{transformer_encoder_packed.1} parent=1 // pred_check_branch
      %20 = sbr.rel (0) target = $region13
    $region12: #{transformer_encoder_packed.1} parent=1 // pred_region
      _
    $region13: #{transformer_encoder_packed.1} parent=1 // pred_fallthru
      _
    // Predicated region
    $region14: #{transformer_encoder_packed.1} parent=1 // pred_check
      _
    $region15: #{transformer_encoder_packed.1} parent=1 // pred_check_branch
      %22 = sbr.rel (0) target = $region17
    $region16: #{transformer_encoder_packed.1} parent=1 // pred_region
      %24 = vsyncadd [#allocation3], 0
      %s25 = sshll.u32 %s3, 4
      %s26 = int_to_ptr.hbm [resolvable:$true] %s25
      %s27 = sshll.u32 [#allocation2], 4
      %s28 = int_to_ptr.vmem [resolvable:$true] %s27
      %33 = dma.hbm_to_vmem [thread:$0]  %s26, 512, %s28, [#allocation3], 128, 128, 8
    $region17: #{transformer_encoder_packed.1} parent=1 // pred_fallthru
      _
    // Predicated region
    $region18: #{transformer_encoder_packed.1} parent=1 // pred_check
      _
    $region19: #{transformer_encoder_packed.1} parent=1 // pred_check_branch
      %35 = sbr.rel (0) target = $region21
    $region20: #{transformer_encoder_packed.1} parent=1 // pred_region
      _
    $region21: #{transformer_encoder_packed.1} parent=1 // pred_fallthru
      _
    // Predicated region
    $region22: #{transformer_encoder_packed.1} parent=1 // pred_check
      _
    $region23: #{transformer_encoder_packed.1} parent=1 // pred_check_branch
      %37 = sbr.rel (0) target = $region25
    $region24: #{transformer_encoder_packed.1} parent=1 // pred_region
      %39 = vsyncadd [#allocation6], 0
      %s41 = sshll.u32 %s5, 4
      %s42 = int_to_ptr.hbm [resolvable:$true] %s41
      %s43 = sshll.u32 [#allocation5], 4
      %s44 = int_to_ptr.vmem [resolvable:$true] %s43
      %46 = dma.hbm_to_vmem [thread:$0]  %s42, 128, %s44, [#allocation6]
    $region25: #{transformer_encoder_packed.1} parent=1 // pred_fallthru
      _
    // Predicated region
    $region26: #{transformer_encoder_packed.1} parent=1 // pred_check
      _
    $region27: #{transformer_encoder_packed.1} parent=1 // pred_check_branch
      %48 = sbr.rel (0) target = $region29
    $region28: #{transformer_encoder_packed.1} parent=1 // pred_region
      %50 = vsyncadd [#allocation6], 0
      %s51 = sshll.u32 %s6, 4
      %s52 = int_to_ptr.hbm [resolvable:$true] %s51
      %s53 = sshll.u32 [#allocation7], 4
      %s54 = int_to_ptr.vmem [resolvable:$true] %s53
      %59 = dma.hbm_to_vmem [thread:$0]  %s52, 512, %s54, [#allocation6], 128, 128, 8
    $region29: #{transformer_encoder_packed.1} parent=1 // pred_fallthru
      _
    // Predicated region
    $region30: #{transformer_encoder_packed.1} parent=1 // pred_check
      _
    $region31: #{transformer_encoder_packed.1} parent=1 // pred_check_branch
      %61 = sbr.rel (0) target = $region33
    $region32: #{transformer_encoder_packed.1} parent=1 // pred_region
      %63 = dma.done [#allocation3], 512
    $region33: #{transformer_encoder_packed.1} parent=1 // pred_fallthru
      _
    // Predicated region
    $region34: #{transformer_encoder_packed.1} parent=1 // pred_check
      _
    $region35: #{transformer_encoder_packed.1} parent=1 // pred_check_branch
      %65 = sbr.rel (0) target = $region37
    $region36: #{transformer_encoder_packed.1} parent=1 // pred_region
      %67 = dma.done [#allocation6], 128
    $region37: #{transformer_encoder_packed.1} parent=1 // pred_fallthru
      _
    // Predicated region
    $region38: #{transformer_encoder_packed.1} parent=1 // pred_check
      _
    $region39: #{transformer_encoder_packed.1} parent=1 // pred_check_branch
      %69 = sbr.rel (0) target = $region41
    $region40: #{transformer_encoder_packed.1} parent=1 // pred_region
      %71 = dma.done [#allocation6], 512
    $region41: #{transformer_encoder_packed.1} parent=1 // pred_fallthru
      _
    %v72 = vld [vmem:[%s0] sm:$0xff]
    %v73 = vld [vmem:[%s0 + $0x8] sm:$0xff]
    %v74 = vld [vmem:[%s0 + $0x10] sm:$0xff]
    %v75 = vld [vmem:[%s0 + $0x18] sm:$0xff]
    %v76 = vld [vmem:[#allocation5] sm:$0x1]
    %v77 = vld [vmem:[#allocation5 + $0x1] sm:$0x1]
    %v78 = vld [vmem:[#allocation5 + $0x2] sm:$0x1]
    %v79 = vld [vmem:[#allocation5 + $0x3] sm:$0x1]
    %v80 = vld [vmem:[#allocation5 + $0x4] sm:$0x1]
    %v81 = vld [vmem:[#allocation5 + $0x5] sm:$0x1]
    %v82 = vld [vmem:[#allocation5 + $0x6] sm:$0x1]
    %v83 = vld [vmem:[#allocation5 + $0x7] sm:$0x1]
    %vm84 = vcmask 261120
    %v85 = vsel %vm84, %v72, 0.0
    %86 = vadd.xlane.f32.xlu0 %v85
    %v87 = vpop.xlane.xlu0 %86
    %v88 = vsel %vm84, %v73, 0.0
    %89 = vadd.xlane.f32.xlu0 %v88
    %v90 = vpop.xlane.xlu0 %89
    %v91 = vsel %vm84, %v74, 0.0
    %92 = vadd.xlane.f32.xlu0 %v91
    %v93 = vpop.xlane.xlu0 %92
    %v94 = vsel %vm84, %v75, 0.0
    %95 = vadd.xlane.f32.xlu0 %v94
    %v96 = vpop.xlane.xlu0 %95
    %v97 = vrcp.pop 32.0
    %v98 = vmul.f32 32.0, %v97
    %v99 = vsub.f32 1.0, %v98
    %v100 = vmul.f32 %v97, %v99
    %v101 = vadd.f32 %v97, %v100
    %vm102 = vweird.f32 %v97
    %v103 = vsel %vm102, %v97, %v101
    %v104 = vmul.f32 %v87, %v103
    %v105 = vmul.f32 %v90, %v103
    %v106 = vmul.f32 %v93, %v103
    %v107 = vmul.f32 %v96, %v103
    %v108 = vmul.f32 %v72, %v72
    %v109 = vmul.f32 %v73, %v73
    %v110 = vmul.f32 %v74, %v74
    %v111 = vmul.f32 %v75, %v75
    %v112 = vsel %vm84, %v108, 0.0
    %113 = vadd.xlane.f32.xlu0 %v112
    %v114 = vpop.xlane.xlu0 %113
    %v115 = vsel %vm84, %v109, 0.0
    %116 = vadd.xlane.f32.xlu0 %v115
    %v117 = vpop.xlane.xlu0 %116
    %v118 = vsel %vm84, %v110, 0.0
    %119 = vadd.xlane.f32.xlu0 %v118
    %v120 = vpop.xlane.xlu0 %119
    %v121 = vsel %vm84, %v111, 0.0
    %122 = vadd.xlane.f32.xlu0 %v121
    %v123 = vpop.xlane.xlu0 %122
    %v124 = vmul.f32 %v114, %v103
    %v125 = vmul.f32 %v117, %v103
    %v126 = vmul.f32 %v120, %v103
    %v127 = vmul.f32 %v123, %v103
    %v128 = vmul.f32 %v104, %v104
    %v129 = vmul.f32 %v105, %v105
    %v130 = vmul.f32 %v106, %v106
    %v131 = vmul.f32 %v107, %v107
    %v132 = vsub.f32 %v124, %v128
    %v133 = vsub.f32 %v125, %v129
    %v134 = vsub.f32 %v126, %v130
    %v135 = vsub.f32 %v127, %v131
    %v136 = vsub.f32 %v72, %v104
    %v137 = vsub.f32 %v73, %v105
    %v138 = vsub.f32 %v74, %v106
    %v139 = vsub.f32 %v75, %v107
    %v140 = vadd.f32 %v132, 1e-05
    %v141 = vadd.f32 %v133, 1e-05
    %v142 = vadd.f32 %v134, 1e-05
    %v143 = vadd.f32 %v135, 1e-05
    %v144 = vrsqrt.pop %v140
    %v145 = vmul.f32 %v144, %v140
    %v146 = vmul.f32 %v145, %v144
    %v147 = vmul.f32 0.5, %v146
    %v148 = vsub.f32 1.5, %v147
    %v149 = vmul.f32 %v144, %v148
    %vm150 = vweird.f32 %v140
    %vm151 = vweird.f32 %v144
    %vm152 = vmor %vm150, %vm151
    %v153 = vsel %vm152, %v144, %v149
    %v154 = vrsqrt.pop %v141
    %v155 = vmul.f32 %v154, %v141
    %v156 = vmul.f32 %v155, %v154
    %v157 = vmul.f32 0.5, %v156
    %v158 = vsub.f32 1.5, %v157
    %v159 = vmul.f32 %v154, %v158
    %vm160 = vweird.f32 %v141
    %vm161 = vweird.f32 %v154
    %vm162 = vmor %vm160, %vm161
    %v163 = vsel %vm162, %v154, %v159
    %v164 = vrsqrt.pop %v142
    %v165 = vmul.f32 %v164, %v142
    %v166 = vmul.f32 %v165, %v164
    %v167 = vmul.f32 0.5, %v166
    %v168 = vsub.f32 1.5, %v167
    %v169 = vmul.f32 %v164, %v168
    %vm170 = vweird.f32 %v142
    %vm171 = vweird.f32 %v164
    %vm172 = vmor %vm170, %vm171
    %v173 = vsel %vm172, %v164, %v169
    %v174 = vrsqrt.pop %v143
    %v175 = vmul.f32 %v174, %v143
    %v176 = vmul.f32 %v175, %v174
    %v177 = vmul.f32 0.5, %v176
    %v178 = vsub.f32 1.5, %v177
    %v179 = vmul.f32 %v174, %v178
    %vm180 = vweird.f32 %v143
    %vm181 = vweird.f32 %v174
    %vm182 = vmor %vm180, %vm181
    %v183 = vsel %vm182, %v174, %v179
    %v184 = vmul.f32 %v136, %v153
    %v185 = vmul.f32 %v137, %v163
    %v186 = vmul.f32 %v138, %v173
    %v187 = vmul.f32 %v139, %v183
    %v188 = vperm.slane %v76, 0
    %v189 = vmul.f32 %v184, %v188
    %v190 = vmul.f32 %v185, %v188
    %v191 = vmul.f32 %v186, %v188
    %v192 = vmul.f32 %v187, %v188
    %v193 = vperm.slane %v77, 0
    %v194 = vadd.f32 %v189, %v193
    %v195 = vadd.f32 %v190, %v193
    %v196 = vadd.f32 %v191, %v193
    %v197 = vadd.f32 %v192, %v193
    %v198 = vld [vmem:[%s1] sm:$0xff]
    %v199 = vld [vmem:[%s1 + $0x8] sm:$0xff]
    %v200 = vld [vmem:[%s1 + $0x10] sm:$0xff]
    %v201 = vld [vmem:[%s1 + $0x18] sm:$0xff]
    %v202 = vperm.slane %v78, 0
    %v204 = vsel %vm84, %v194, 0
    %v207 = vsel %vm84, %v195, 0
    %v210 = vsel %vm84, %v196, 0
    %v213 = vsel %vm84, %v197, 0
    %215 = vmatpush.msra.mxu0 0.0
    %216 = vmatpush.msra.mxu0 0.0
    %217 = vmatpush.msra.mxu0 0.0
    %218 = vmatpush.msra.mxu0 0.0
    %219 = vmatpush.msra.mxu0 0.0
    %220 = vmatpush.msra.mxu0 0.0
    %221 = vmatpush.msra.mxu0 0.0
    %222 = vmatpush.msra.mxu0 0.0
    %223 = vmatpush.msra.mxu0 0.0
    %224 = vmatpush.msra.mxu0 0.0
    %225 = vmatpush.msra.mxu0 0.0
    %226 = vmatpush.msra.mxu0 0.0
    %227 = vmatpush.msra.mxu0 %v201
    %228 = vmatpush.msra.mxu0 %v200
    %229 = vmatpush.msra.mxu0 %v199
    %230 = vmatpush.msra.mxu0 %v198
    %231 = vmatmul.f32.gmra.mxu0 %v204
    %v232 = vpop.f32.mrf.mxu0
    %v233 = vadd.f32 %v202, %v232
    %234 = vmatmul.f32.gmra.mxu0 %v207
    %v235 = vpop.f32.mrf.mxu0
    %v236 = vadd.f32 %v202, %v235
    %237 = vmatmul.f32.gmra.mxu0 %v210
    %v238 = vpop.f32.mrf.mxu0
    %v239 = vadd.f32 %v202, %v238
    %240 = vmatmul.f32.gmra.mxu0 %v213
    %v241 = vpop.f32.mrf.mxu0
    %v242 = vadd.f32 %v202, %v241
    %243 = vdwg.mxu0
    %v244 = vld [vmem:[#allocation7] sm:$0xff]
    %v245 = vld [vmem:[#allocation7 + $0x8] sm:$0xff]
    %v246 = vld [vmem:[#allocation7 + $0x10] sm:$0xff]
    %v247 = vld [vmem:[#allocation7 + $0x18] sm:$0xff]
    %252 = vrot.lane.b32.xlu0 %v233, 96
    %v253 = vpop.permute.xlu0 %252
    %254 = vrot.lane.b32.xlu0 %v236, 96
    %v255 = vpop.permute.xlu0 %254
    %256 = vrot.lane.b32.xlu0 %v239, 96
    %v257 = vpop.permute.xlu0 %256
    %258 = vrot.lane.b32.xlu0 %v242, 96
    %v259 = vpop.permute.xlu0 %258
    %vm260 = vcmask 64512
    %v261 = vsel %vm260, %v233, 0
    %v263 = vsel %vm260, %v236, 0
    %v265 = vsel %vm260, %v239, 0
    %v267 = vsel %vm260, %v242, 0
    %v269 = vsel %vm260, %v253, 0
    %v271 = vsel %vm260, %v255, 0
    %v273 = vsel %vm260, %v257, 0
    %v275 = vsel %vm260, %v259, 0
    %277 = vmatpush.xpose.msra.mxu0 0.0
    %278 = vmatpush.xpose.msra.mxu0 0.0
    %279 = vmatpush.xpose.msra.mxu0 0.0
    %280 = vmatpush.xpose.msra.mxu0 0.0
    %281 = vmatpush.xpose.msra.mxu0 0.0
    %282 = vmatpush.xpose.msra.mxu0 0.0
    %283 = vmatpush.xpose.msra.mxu0 0.0
    %284 = vmatpush.xpose.msra.mxu0 0.0
    %285 = vmatpush.xpose.msra.mxu0 0.0
    %286 = vmatpush.xpose.msra.mxu0 0.0
    %287 = vmatpush.xpose.msra.mxu0 0.0
    %288 = vmatpush.xpose.msra.mxu0 0.0
    %289 = vmatpush.xpose.msra.mxu0 %v275
    %290 = vmatpush.xpose.msra.mxu0 %v273
    %291 = vmatpush.xpose.msra.mxu0 %v271
    %292 = vmatpush.xpose.msra.mxu0 %v269
    %293 = vmatmul.f32.gmra.mxu0 %v261
    %v294 = vpop.f32.mrf.mxu0
    %v295 = vadd.f32 %v244, %v294
    %296 = vmatmul.f32.gmra.mxu0 %v263
    %v297 = vpop.f32.mrf.mxu0
    %v298 = vadd.f32 %v245, %v297
    %299 = vmatmul.f32.gmra.mxu0 %v265
    %v300 = vpop.f32.mrf.mxu0
    %v301 = vadd.f32 %v246, %v300
    %302 = vmatmul.f32.gmra.mxu0 %v267
    %v303 = vpop.f32.mrf.mxu0
    %v304 = vadd.f32 %v247, %v303
    %305 = vdwg.mxu0
    %v306 = vsel %vm84, %v295, -inf
    %307 = vmax.xlane.f32.xlu0 %v306
    %v308 = vpop.xlane.xlu0 %307
    %v309 = vsel %vm84, %v298, -inf
    %310 = vmax.xlane.f32.xlu0 %v309
    %v311 = vpop.xlane.xlu0 %310
    %v312 = vsel %vm84, %v301, -inf
    %313 = vmax.xlane.f32.xlu0 %v312
    %v314 = vpop.xlane.xlu0 %313
    %v315 = vsel %vm84, %v304, -inf
    %316 = vmax.xlane.f32.xlu0 %v315
    %v317 = vpop.xlane.xlu0 %316
    %v318 = vsub.f32 %v295, %v308
    %v319 = vsub.f32 %v298, %v311
    %v320 = vsub.f32 %v301, %v314
    %v321 = vsub.f32 %v304, %v317
    %v322 = vmul.f32 %v318, 1.442695
    %v323 = vpow.pop %v322
    %v324 = vmul.f32 %v319, 1.442695
    %v325 = vpow.pop %v324
    %v326 = vmul.f32 %v320, 1.442695
    %v327 = vpow.pop %v326
    %v328 = vmul.f32 %v321, 1.442695
    %v329 = vpow.pop %v328
    %v330 = vsel %vm84, %v323, 0.0
    %331 = vadd.xlane.f32.xlu0 %v330
    %v332 = vpop.xlane.xlu0 %331
    %v333 = vsel %vm84, %v325, 0.0
    %334 = vadd.xlane.f32.xlu0 %v333
    %v335 = vpop.xlane.xlu0 %334
    %v336 = vsel %vm84, %v327, 0.0
    %337 = vadd.xlane.f32.xlu0 %v336
    %v338 = vpop.xlane.xlu0 %337
    %v339 = vsel %vm84, %v329, 0.0
    %340 = vadd.xlane.f32.xlu0 %v339
    %v341 = vpop.xlane.xlu0 %340
    %v342 = vrcp.pop %v332
    %v343 = vmul.f32 %v332, %v342
    %v344 = vsub.f32 1.0, %v343
    %v345 = vmul.f32 %v342, %v344
    %v346 = vadd.f32 %v342, %v345
    %vm347 = vweird.f32 %v332
    %vm348 = vweird.f32 %v342
    %vm349 = vmor %vm347, %vm348
    %v350 = vsel %vm349, %v342, %v346
    %v351 = vand.u32 2147483647, %v332
    %vm352 = vcmp.eq.f32.partialorder %v351, 8.507059e+37
    %v353 = vand.u32 %v332, 2147483648
    %v354 = vor.u32 1.1754944e-38, %v353
    %v355 = vsel %vm352, %v354, %v350
    %v356 = vmul.f32 %v323, %v355
    %v357 = vrcp.pop %v335
    %v358 = vmul.f32 %v335, %v357
    %v359 = vsub.f32 1.0, %v358
    %v360 = vmul.f32 %v357, %v359
    %v361 = vadd.f32 %v357, %v360
    %vm362 = vweird.f32 %v335
    %vm363 = vweird.f32 %v357
    %vm364 = vmor %vm362, %vm363
    %v365 = vsel %vm364, %v357, %v361
    %v366 = vand.u32 2147483647, %v335
    %vm367 = vcmp.eq.f32.partialorder %v366, 8.507059e+37
    %v368 = vand.u32 %v335, 2147483648
    %v369 = vor.u32 1.1754944e-38, %v368
    %v370 = vsel %vm367, %v369, %v365
    %v371 = vmul.f32 %v325, %v370
    %v372 = vrcp.pop %v338
    %v373 = vmul.f32 %v338, %v372
    %v374 = vsub.f32 1.0, %v373
    %v375 = vmul.f32 %v372, %v374
    %v376 = vadd.f32 %v372, %v375
    %vm377 = vweird.f32 %v338
    %vm378 = vweird.f32 %v372
    %vm379 = vmor %vm377, %vm378
    %v380 = vsel %vm379, %v372, %v376
    %v381 = vand.u32 2147483647, %v338
    %vm382 = vcmp.eq.f32.partialorder %v381, 8.507059e+37
    %v383 = vand.u32 %v338, 2147483648
    %v384 = vor.u32 1.1754944e-38, %v383
    %v385 = vsel %vm382, %v384, %v380
    %v386 = vmul.f32 %v327, %v385
    %v387 = vrcp.pop %v341
    %v388 = vmul.f32 %v341, %v387
    %v389 = vsub.f32 1.0, %v388
    %v390 = vmul.f32 %v387, %v389
    %v391 = vadd.f32 %v387, %v390
    %vm392 = vweird.f32 %v341
    %vm393 = vweird.f32 %v387
    %vm394 = vmor %vm392, %vm393
    %v395 = vsel %vm394, %v387, %v391
    %v396 = vand.u32 2147483647, %v341
    %vm397 = vcmp.eq.f32.partialorder %v396, 8.507059e+37
    %v398 = vand.u32 %v341, 2147483648
    %v399 = vor.u32 1.1754944e-38, %v398
    %v400 = vsel %vm397, %v399, %v395
    %v401 = vmul.f32 %v329, %v400
    %402 = vrot.lane.b32.xlu0 %v233, 64
    %v403 = vpop.permute.xlu0 %402
    %404 = vrot.lane.b32.xlu0 %v236, 64
    %v405 = vpop.permute.xlu0 %404
    %406 = vrot.lane.b32.xlu0 %v239, 64
    %v407 = vpop.permute.xlu0 %406
    %408 = vrot.lane.b32.xlu0 %v242, 64
    %v409 = vpop.permute.xlu0 %408
    %v415 = vsel %vm84, %v356, 0
    %v418 = vsel %vm84, %v371, 0
    %v421 = vsel %vm84, %v386, 0
    %v424 = vsel %vm84, %v401, 0
    %426 = vmatpush.msra.mxu0 0.0
    %427 = vmatpush.msra.mxu0 0.0
    %428 = vmatpush.msra.mxu0 0.0
    %429 = vmatpush.msra.mxu0 0.0
    %430 = vmatpush.msra.mxu0 0.0
    %431 = vmatpush.msra.mxu0 0.0
    %432 = vmatpush.msra.mxu0 0.0
    %433 = vmatpush.msra.mxu0 0.0
    %434 = vmatpush.msra.mxu0 0.0
    %435 = vmatpush.msra.mxu0 0.0
    %436 = vmatpush.msra.mxu0 0.0
    %437 = vmatpush.msra.mxu0 0.0
    %438 = vmatpush.msra.mxu0 %v409
    %439 = vmatpush.msra.mxu0 %v407
    %440 = vmatpush.msra.mxu0 %v405
    %441 = vmatpush.msra.mxu0 %v403
    %442 = vmatmul.f32.gmra.mxu0 %v415
    %v443 = vpop.f32.mrf.mxu0
    %v444 = vadd.f32 0.0, %v443
    %445 = vmatmul.f32.gmra.mxu0 %v418
    %v446 = vpop.f32.mrf.mxu0
    %v447 = vadd.f32 0.0, %v446
    %448 = vmatmul.f32.gmra.mxu0 %v421
    %v449 = vpop.f32.mrf.mxu0
    %v450 = vadd.f32 0.0, %v449
    %451 = vmatmul.f32.gmra.mxu0 %v424
    %v452 = vpop.f32.mrf.mxu0
    %v453 = vadd.f32 0.0, %v452
    %454 = vdwg.mxu0
    %455 = vrot.lane.b32.xlu0 %v233, 120
    %v456 = vpop.permute.xlu0 %455
    %457 = vrot.lane.b32.xlu0 %v236, 120
    %v458 = vpop.permute.xlu0 %457
    %459 = vrot.lane.b32.xlu0 %v239, 120
    %v460 = vpop.permute.xlu0 %459
    %461 = vrot.lane.b32.xlu0 %v242, 120
    %v462 = vpop.permute.xlu0 %461
    %463 = vrot.lane.b32.xlu0 %v233, 88
    %v464 = vpop.permute.xlu0 %463
    %465 = vrot.lane.b32.xlu0 %v236, 88
    %v466 = vpop.permute.xlu0 %465
    %467 = vrot.lane.b32.xlu0 %v239, 88
    %v468 = vpop.permute.xlu0 %467
    %469 = vrot.lane.b32.xlu0 %v242, 88
    %v470 = vpop.permute.xlu0 %469
    %v471 = vsel %vm260, %v456, 0
    %v473 = vsel %vm260, %v458, 0
    %v475 = vsel %vm260, %v460, 0
    %v477 = vsel %vm260, %v462, 0
    %v479 = vsel %vm260, %v464, 0
    %v481 = vsel %vm260, %v466, 0
    %v483 = vsel %vm260, %v468, 0
    %v485 = vsel %vm260, %v470, 0
    %487 = vmatpush.xpose.msra.mxu0 0.0
    %488 = vmatpush.xpose.msra.mxu0 0.0
    %489 = vmatpush.xpose.msra.mxu0 0.0
    %490 = vmatpush.xpose.msra.mxu0 0.0
    %491 = vmatpush.xpose.msra.mxu0 0.0
    %492 = vmatpush.xpose.msra.mxu0 0.0
    %493 = vmatpush.xpose.msra.mxu0 0.0
    %494 = vmatpush.xpose.msra.mxu0 0.0
    %495 = vmatpush.xpose.msra.mxu0 0.0
    %496 = vmatpush.xpose.msra.mxu0 0.0
    %497 = vmatpush.xpose.msra.mxu0 0.0
    %498 = vmatpush.xpose.msra.mxu0 0.0
    %499 = vmatpush.xpose.msra.mxu0 %v485
    %500 = vmatpush.xpose.msra.mxu0 %v483
    %501 = vmatpush.xpose.msra.mxu0 %v481
    %502 = vmatpush.xpose.msra.mxu0 %v479
    %503 = vmatmul.f32.gmra.mxu0 %v471
    %v504 = vpop.f32.mrf.mxu0
    %v505 = vadd.f32 %v244, %v504
    %506 = vmatmul.f32.gmra.mxu0 %v473
    %v507 = vpop.f32.mrf.mxu0
    %v508 = vadd.f32 %v245, %v507
    %509 = vmatmul.f32.gmra.mxu0 %v475
    %v510 = vpop.f32.mrf.mxu0
    %v511 = vadd.f32 %v246, %v510
    %512 = vmatmul.f32.gmra.mxu0 %v477
    %v513 = vpop.f32.mrf.mxu0
    %v514 = vadd.f32 %v247, %v513
    %515 = vdwg.mxu0
    %v516 = vsel %vm84, %v505, -inf
    %517 = vmax.xlane.f32.xlu0 %v516
    %v518 = vpop.xlane.xlu0 %517
    %v519 = vsel %vm84, %v508, -inf
    %520 = vmax.xlane.f32.xlu0 %v519
    %v521 = vpop.xlane.xlu0 %520
    %v522 = vsel %vm84, %v511, -inf
    %523 = vmax.xlane.f32.xlu0 %v522
    %v524 = vpop.xlane.xlu0 %523
    %v525 = vsel %vm84, %v514, -inf
    %526 = vmax.xlane.f32.xlu0 %v525
    %v527 = vpop.xlane.xlu0 %526
    %v528 = vsub.f32 %v505, %v518
    %v529 = vsub.f32 %v508, %v521
    %v530 = vsub.f32 %v511, %v524
    %v531 = vsub.f32 %v514, %v527
    %v532 = vmul.f32 %v528, 1.442695
    %v533 = vpow.pop %v532
    %v534 = vmul.f32 %v529, 1.442695
    %v535 = vpow.pop %v534
    %v536 = vmul.f32 %v530, 1.442695
    %v537 = vpow.pop %v536
    %v538 = vmul.f32 %v531, 1.442695
    %v539 = vpow.pop %v538
    %v540 = vsel %vm84, %v533, 0.0
    %541 = vadd.xlane.f32.xlu0 %v540
    %v542 = vpop.xlane.xlu0 %541
    %v543 = vsel %vm84, %v535, 0.0
    %544 = vadd.xlane.f32.xlu0 %v543
    %v545 = vpop.xlane.xlu0 %544
    %v546 = vsel %vm84, %v537, 0.0
    %547 = vadd.xlane.f32.xlu0 %v546
    %v548 = vpop.xlane.xlu0 %547
    %v549 = vsel %vm84, %v539, 0.0
    %550 = vadd.xlane.f32.xlu0 %v549
    %v551 = vpop.xlane.xlu0 %550
    %v552 = vrcp.pop %v542
    %v553 = vmul.f32 %v542, %v552
    %v554 = vsub.f32 1.0, %v553
    %v555 = vmul.f32 %v552, %v554
    %v556 = vadd.f32 %v552, %v555
    %vm557 = vweird.f32 %v542
    %vm558 = vweird.f32 %v552
    %vm559 = vmor %vm557, %vm558
    %v560 = vsel %vm559, %v552, %v556
    %v561 = vand.u32 2147483647, %v542
    %vm562 = vcmp.eq.f32.partialorder %v561, 8.507059e+37
    %v563 = vand.u32 %v542, 2147483648
    %v564 = vor.u32 1.1754944e-38, %v563
    %v565 = vsel %vm562, %v564, %v560
    %v566 = vmul.f32 %v533, %v565
    %v567 = vrcp.pop %v545
    %v568 = vmul.f32 %v545, %v567
    %v569 = vsub.f32 1.0, %v568
    %v570 = vmul.f32 %v567, %v569
    %v571 = vadd.f32 %v567, %v570
    %vm572 = vweird.f32 %v545
    %vm573 = vweird.f32 %v567
    %vm574 = vmor %vm572, %vm573
    %v575 = vsel %vm574, %v567, %v571
    %v576 = vand.u32 2147483647, %v545
    %vm577 = vcmp.eq.f32.partialorder %v576, 8.507059e+37
    %v578 = vand.u32 %v545, 2147483648
    %v579 = vor.u32 1.1754944e-38, %v578
    %v580 = vsel %vm577, %v579, %v575
    %v581 = vmul.f32 %v535, %v580
    %v582 = vrcp.pop %v548
    %v583 = vmul.f32 %v548, %v582
    %v584 = vsub.f32 1.0, %v583
    %v585 = vmul.f32 %v582, %v584
    %v586 = vadd.f32 %v582, %v585
    %vm587 = vweird.f32 %v548
    %vm588 = vweird.f32 %v582
    %vm589 = vmor %vm587, %vm588
    %v590 = vsel %vm589, %v582, %v586
    %v591 = vand.u32 2147483647, %v548
    %vm592 = vcmp.eq.f32.partialorder %v591, 8.507059e+37
    %v593 = vand.u32 %v548, 2147483648
    %v594 = vor.u32 1.1754944e-38, %v593
    %v595 = vsel %vm592, %v594, %v590
    %v596 = vmul.f32 %v537, %v595
    %v597 = vrcp.pop %v551
    %v598 = vmul.f32 %v551, %v597
    %v599 = vsub.f32 1.0, %v598
    %v600 = vmul.f32 %v597, %v599
    %v601 = vadd.f32 %v597, %v600
    %vm602 = vweird.f32 %v551
    %vm603 = vweird.f32 %v597
    %vm604 = vmor %vm602, %vm603
    %v605 = vsel %vm604, %v597, %v601
    %v606 = vand.u32 2147483647, %v551
    %vm607 = vcmp.eq.f32.partialorder %v606, 8.507059e+37
    %v608 = vand.u32 %v551, 2147483648
    %v609 = vor.u32 1.1754944e-38, %v608
    %v610 = vsel %vm607, %v609, %v605
    %v611 = vmul.f32 %v539, %v610
    %612 = vrot.lane.b32.xlu0 %v233, 56
    %v613 = vpop.permute.xlu0 %612
    %614 = vrot.lane.b32.xlu0 %v236, 56
    %v615 = vpop.permute.xlu0 %614
    %616 = vrot.lane.b32.xlu0 %v239, 56
    %v617 = vpop.permute.xlu0 %616
    %618 = vrot.lane.b32.xlu0 %v242, 56
    %v619 = vpop.permute.xlu0 %618
    %v625 = vsel %vm84, %v566, 0
    %v628 = vsel %vm84, %v581, 0
    %v631 = vsel %vm84, %v596, 0
    %v634 = vsel %vm84, %v611, 0
    %636 = vmatpush.msra.mxu0 0.0
    %637 = vmatpush.msra.mxu0 0.0
    %638 = vmatpush.msra.mxu0 0.0
    %639 = vmatpush.msra.mxu0 0.0
    %640 = vmatpush.msra.mxu0 0.0
    %641 = vmatpush.msra.mxu0 0.0
    %642 = vmatpush.msra.mxu0 0.0
    %643 = vmatpush.msra.mxu0 0.0
    %644 = vmatpush.msra.mxu0 0.0
    %645 = vmatpush.msra.mxu0 0.0
    %646 = vmatpush.msra.mxu0 0.0
    %647 = vmatpush.msra.mxu0 0.0
    %648 = vmatpush.msra.mxu0 %v619
    %649 = vmatpush.msra.mxu0 %v617
    %650 = vmatpush.msra.mxu0 %v615
    %651 = vmatpush.msra.mxu0 %v613
    %652 = vmatmul.f32.gmra.mxu0 %v625
    %v653 = vpop.f32.mrf.mxu0
    %v654 = vadd.f32 0.0, %v653
    %655 = vmatmul.f32.gmra.mxu0 %v628
    %v656 = vpop.f32.mrf.mxu0
    %v657 = vadd.f32 0.0, %v656
    %658 = vmatmul.f32.gmra.mxu0 %v631
    %v659 = vpop.f32.mrf.mxu0
    %v660 = vadd.f32 0.0, %v659
    %661 = vmatmul.f32.gmra.mxu0 %v634
    %v662 = vpop.f32.mrf.mxu0
    %v663 = vadd.f32 0.0, %v662
    %664 = vdwg.mxu0
    %665 = vrot.lane.b32.xlu0 %v233, 112
    %v666 = vpop.permute.xlu0 %665
    %667 = vrot.lane.b32.xlu0 %v236, 112
    %v668 = vpop.permute.xlu0 %667
    %669 = vrot.lane.b32.xlu0 %v239, 112
    %v670 = vpop.permute.xlu0 %669
    %671 = vrot.lane.b32.xlu0 %v242, 112
    %v672 = vpop.permute.xlu0 %671
    %673 = vrot.lane.b32.xlu0 %v233, 80
    %v674 = vpop.permute.xlu0 %673
    %675 = vrot.lane.b32.xlu0 %v236, 80
    %v676 = vpop.permute.xlu0 %675
    %677 = vrot.lane.b32.xlu0 %v239, 80
    %v678 = vpop.permute.xlu0 %677
    %679 = vrot.lane.b32.xlu0 %v242, 80
    %v680 = vpop.permute.xlu0 %679
    %v681 = vsel %vm260, %v666, 0
    %v683 = vsel %vm260, %v668, 0
    %v685 = vsel %vm260, %v670, 0
    %v687 = vsel %vm260, %v672, 0
    %v689 = vsel %vm260, %v674, 0
    %v691 = vsel %vm260, %v676, 0
    %v693 = vsel %vm260, %v678, 0
    %v695 = vsel %vm260, %v680, 0
    %697 = vmatpush.xpose.msra.mxu0 0.0
    %698 = vmatpush.xpose.msra.mxu0 0.0
    %699 = vmatpush.xpose.msra.mxu0 0.0
    %700 = vmatpush.xpose.msra.mxu0 0.0
    %701 = vmatpush.xpose.msra.mxu0 0.0
    %702 = vmatpush.xpose.msra.mxu0 0.0
    %703 = vmatpush.xpose.msra.mxu0 0.0
    %704 = vmatpush.xpose.msra.mxu0 0.0
    %705 = vmatpush.xpose.msra.mxu0 0.0
    %706 = vmatpush.xpose.msra.mxu0 0.0
    %707 = vmatpush.xpose.msra.mxu0 0.0
    %708 = vmatpush.xpose.msra.mxu0 0.0
    %709 = vmatpush.xpose.msra.mxu0 %v695
    %710 = vmatpush.xpose.msra.mxu0 %v693
    %711 = vmatpush.xpose.msra.mxu0 %v691
    %712 = vmatpush.xpose.msra.mxu0 %v689
    %713 = vmatmul.f32.gmra.mxu0 %v681
    %v714 = vpop.f32.mrf.mxu0
    %v715 = vadd.f32 %v244, %v714
    %716 = vmatmul.f32.gmra.mxu0 %v683
    %v717 = vpop.f32.mrf.mxu0
    %v718 = vadd.f32 %v245, %v717
    %719 = vmatmul.f32.gmra.mxu0 %v685
    %v720 = vpop.f32.mrf.mxu0
    %v721 = vadd.f32 %v246, %v720
    %722 = vmatmul.f32.gmra.mxu0 %v687
    %v723 = vpop.f32.mrf.mxu0
    %v724 = vadd.f32 %v247, %v723
    %725 = vdwg.mxu0
    %v726 = vsel %vm84, %v715, -inf
    %727 = vmax.xlane.f32.xlu0 %v726
    %v728 = vpop.xlane.xlu0 %727
    %v729 = vsel %vm84, %v718, -inf
    %730 = vmax.xlane.f32.xlu0 %v729
    %v731 = vpop.xlane.xlu0 %730
    %v732 = vsel %vm84, %v721, -inf
    %733 = vmax.xlane.f32.xlu0 %v732
    %v734 = vpop.xlane.xlu0 %733
    %v735 = vsel %vm84, %v724, -inf
    %736 = vmax.xlane.f32.xlu0 %v735
    %v737 = vpop.xlane.xlu0 %736
    %v738 = vsub.f32 %v715, %v728
    %v739 = vsub.f32 %v718, %v731
    %v740 = vsub.f32 %v721, %v734
    %v741 = vsub.f32 %v724, %v737
    %v742 = vmul.f32 %v738, 1.442695
    %v743 = vpow.pop %v742
    %v744 = vmul.f32 %v739, 1.442695
    %v745 = vpow.pop %v744
    %v746 = vmul.f32 %v740, 1.442695
    %v747 = vpow.pop %v746
    %v748 = vmul.f32 %v741, 1.442695
    %v749 = vpow.pop %v748
    %v750 = vsel %vm84, %v743, 0.0
    %751 = vadd.xlane.f32.xlu0 %v750
    %v752 = vpop.xlane.xlu0 %751
    %v753 = vsel %vm84, %v745, 0.0
    %754 = vadd.xlane.f32.xlu0 %v753
    %v755 = vpop.xlane.xlu0 %754
    %v756 = vsel %vm84, %v747, 0.0
    %757 = vadd.xlane.f32.xlu0 %v756
    %v758 = vpop.xlane.xlu0 %757
    %v759 = vsel %vm84, %v749, 0.0
    %760 = vadd.xlane.f32.xlu0 %v759
    %v761 = vpop.xlane.xlu0 %760
    %v762 = vrcp.pop %v752
    %v763 = vmul.f32 %v752, %v762
    %v764 = vsub.f32 1.0, %v763
    %v765 = vmul.f32 %v762, %v764
    %v766 = vadd.f32 %v762, %v765
    %vm767 = vweird.f32 %v752
    %vm768 = vweird.f32 %v762
    %vm769 = vmor %vm767, %vm768
    %v770 = vsel %vm769, %v762, %v766
    %v771 = vand.u32 2147483647, %v752
    %vm772 = vcmp.eq.f32.partialorder %v771, 8.507059e+37
    %v773 = vand.u32 %v752, 2147483648
    %v774 = vor.u32 1.1754944e-38, %v773
    %v775 = vsel %vm772, %v774, %v770
    %v776 = vmul.f32 %v743, %v775
    %v777 = vrcp.pop %v755
    %v778 = vmul.f32 %v755, %v777
    %v779 = vsub.f32 1.0, %v778
    %v780 = vmul.f32 %v777, %v779
    %v781 = vadd.f32 %v777, %v780
    %vm782 = vweird.f32 %v755
    %vm783 = vweird.f32 %v777
    %vm784 = vmor %vm782, %vm783
    %v785 = vsel %vm784, %v777, %v781
    %v786 = vand.u32 2147483647, %v755
    %vm787 = vcmp.eq.f32.partialorder %v786, 8.507059e+37
    %v788 = vand.u32 %v755, 2147483648
    %v789 = vor.u32 1.1754944e-38, %v788
    %v790 = vsel %vm787, %v789, %v785
    %v791 = vmul.f32 %v745, %v790
    %v792 = vrcp.pop %v758
    %v793 = vmul.f32 %v758, %v792
    %v794 = vsub.f32 1.0, %v793
    %v795 = vmul.f32 %v792, %v794
    %v796 = vadd.f32 %v792, %v795
    %vm797 = vweird.f32 %v758
    %vm798 = vweird.f32 %v792
    %vm799 = vmor %vm797, %vm798
    %v800 = vsel %vm799, %v792, %v796
    %v801 = vand.u32 2147483647, %v758
    %vm802 = vcmp.eq.f32.partialorder %v801, 8.507059e+37
    %v803 = vand.u32 %v758, 2147483648
    %v804 = vor.u32 1.1754944e-38, %v803
    %v805 = vsel %vm802, %v804, %v800
    %v806 = vmul.f32 %v747, %v805
    %v807 = vrcp.pop %v761
    %v808 = vmul.f32 %v761, %v807
    %v809 = vsub.f32 1.0, %v808
    %v810 = vmul.f32 %v807, %v809
    %v811 = vadd.f32 %v807, %v810
    %vm812 = vweird.f32 %v761
    %vm813 = vweird.f32 %v807
    %vm814 = vmor %vm812, %vm813
    %v815 = vsel %vm814, %v807, %v811
    %v816 = vand.u32 2147483647, %v761
    %vm817 = vcmp.eq.f32.partialorder %v816, 8.507059e+37
    %v818 = vand.u32 %v761, 2147483648
    %v819 = vor.u32 1.1754944e-38, %v818
    %v820 = vsel %vm817, %v819, %v815
    %v821 = vmul.f32 %v749, %v820
    %822 = vrot.lane.b32.xlu0 %v233, 48
    %v823 = vpop.permute.xlu0 %822
    %824 = vrot.lane.b32.xlu0 %v236, 48
    %v825 = vpop.permute.xlu0 %824
    %826 = vrot.lane.b32.xlu0 %v239, 48
    %v827 = vpop.permute.xlu0 %826
    %828 = vrot.lane.b32.xlu0 %v242, 48
    %v829 = vpop.permute.xlu0 %828
    %v835 = vsel %vm84, %v776, 0
    %v838 = vsel %vm84, %v791, 0
    %v841 = vsel %vm84, %v806, 0
    %v844 = vsel %vm84, %v821, 0
    %846 = vmatpush.msra.mxu0 0.0
    %847 = vmatpush.msra.mxu0 0.0
    %848 = vmatpush.msra.mxu0 0.0
    %849 = vmatpush.msra.mxu0 0.0
    %850 = vmatpush.msra.mxu0 0.0
    %851 = vmatpush.msra.mxu0 0.0
    %852 = vmatpush.msra.mxu0 0.0
    %853 = vmatpush.msra.mxu0 0.0
    %854 = vmatpush.msra.mxu0 0.0
    %855 = vmatpush.msra.mxu0 0.0
    %856 = vmatpush.msra.mxu0 0.0
    %857 = vmatpush.msra.mxu0 0.0
    %858 = vmatpush.msra.mxu0 %v829
    %859 = vmatpush.msra.mxu0 %v827
    %860 = vmatpush.msra.mxu0 %v825
    %861 = vmatpush.msra.mxu0 %v823
    %862 = vmatmul.f32.gmra.mxu0 %v835
    %v863 = vpop.f32.mrf.mxu0
    %v864 = vadd.f32 0.0, %v863
    %865 = vmatmul.f32.gmra.mxu0 %v838
    %v866 = vpop.f32.mrf.mxu0
    %v867 = vadd.f32 0.0, %v866
    %868 = vmatmul.f32.gmra.mxu0 %v841
    %v869 = vpop.f32.mrf.mxu0
    %v870 = vadd.f32 0.0, %v869
    %871 = vmatmul.f32.gmra.mxu0 %v844
    %v872 = vpop.f32.mrf.mxu0
    %v873 = vadd.f32 0.0, %v872
    %874 = vdwg.mxu0
    %875 = vrot.lane.b32.xlu0 %v233, 104
    %v876 = vpop.permute.xlu0 %875
    %877 = vrot.lane.b32.xlu0 %v236, 104
    %v878 = vpop.permute.xlu0 %877
    %879 = vrot.lane.b32.xlu0 %v239, 104
    %v880 = vpop.permute.xlu0 %879
    %881 = vrot.lane.b32.xlu0 %v242, 104
    %v882 = vpop.permute.xlu0 %881
    %883 = vrot.lane.b32.xlu0 %v233, 72
    %v884 = vpop.permute.xlu0 %883
    %885 = vrot.lane.b32.xlu0 %v236, 72
    %v886 = vpop.permute.xlu0 %885
    %887 = vrot.lane.b32.xlu0 %v239, 72
    %v888 = vpop.permute.xlu0 %887
    %889 = vrot.lane.b32.xlu0 %v242, 72
    %v890 = vpop.permute.xlu0 %889
    %v891 = vsel %vm260, %v876, 0
    %v893 = vsel %vm260, %v878, 0
    %v895 = vsel %vm260, %v880, 0
    %v897 = vsel %vm260, %v882, 0
    %v899 = vsel %vm260, %v884, 0
    %v901 = vsel %vm260, %v886, 0
    %v903 = vsel %vm260, %v888, 0
    %v905 = vsel %vm260, %v890, 0
    %907 = vmatpush.xpose.msra.mxu0 0.0
    %908 = vmatpush.xpose.msra.mxu0 0.0
    %909 = vmatpush.xpose.msra.mxu0 0.0
    %910 = vmatpush.xpose.msra.mxu0 0.0
    %911 = vmatpush.xpose.msra.mxu0 0.0
    %912 = vmatpush.xpose.msra.mxu0 0.0
    %913 = vmatpush.xpose.msra.mxu0 0.0
    %914 = vmatpush.xpose.msra.mxu0 0.0
    %915 = vmatpush.xpose.msra.mxu0 0.0
    %916 = vmatpush.xpose.msra.mxu0 0.0
    %917 = vmatpush.xpose.msra.mxu0 0.0
    %918 = vmatpush.xpose.msra.mxu0 0.0
    %919 = vmatpush.xpose.msra.mxu0 %v905
    %920 = vmatpush.xpose.msra.mxu0 %v903
    %921 = vmatpush.xpose.msra.mxu0 %v901
    %922 = vmatpush.xpose.msra.mxu0 %v899
    %923 = vmatmul.f32.gmra.mxu0 %v891
    %v924 = vpop.f32.mrf.mxu0
    %v925 = vadd.f32 %v244, %v924
    %926 = vmatmul.f32.gmra.mxu0 %v893
    %v927 = vpop.f32.mrf.mxu0
    %v928 = vadd.f32 %v245, %v927
    %929 = vmatmul.f32.gmra.mxu0 %v895
    %v930 = vpop.f32.mrf.mxu0
    %v931 = vadd.f32 %v246, %v930
    %932 = vmatmul.f32.gmra.mxu0 %v897
    %v933 = vpop.f32.mrf.mxu0
    %v934 = vadd.f32 %v247, %v933
    %935 = vdwg.mxu0
    %v936 = vsel %vm84, %v925, -inf
    %937 = vmax.xlane.f32.xlu0 %v936
    %v938 = vpop.xlane.xlu0 %937
    %v939 = vsel %vm84, %v928, -inf
    %940 = vmax.xlane.f32.xlu0 %v939
    %v941 = vpop.xlane.xlu0 %940
    %v942 = vsel %vm84, %v931, -inf
    %943 = vmax.xlane.f32.xlu0 %v942
    %v944 = vpop.xlane.xlu0 %943
    %v945 = vsel %vm84, %v934, -inf
    %946 = vmax.xlane.f32.xlu0 %v945
    %v947 = vpop.xlane.xlu0 %946
    %v948 = vsub.f32 %v925, %v938
    %v949 = vsub.f32 %v928, %v941
    %v950 = vsub.f32 %v931, %v944
    %v951 = vsub.f32 %v934, %v947
    %v952 = vmul.f32 %v948, 1.442695
    %v953 = vpow.pop %v952
    %v954 = vmul.f32 %v949, 1.442695
    %v955 = vpow.pop %v954
    %v956 = vmul.f32 %v950, 1.442695
    %v957 = vpow.pop %v956
    %v958 = vmul.f32 %v951, 1.442695
    %v959 = vpow.pop %v958
    %v960 = vsel %vm84, %v953, 0.0
    %961 = vadd.xlane.f32.xlu0 %v960
    %v962 = vpop.xlane.xlu0 %961
    %v963 = vsel %vm84, %v955, 0.0
    %964 = vadd.xlane.f32.xlu0 %v963
    %v965 = vpop.xlane.xlu0 %964
    %v966 = vsel %vm84, %v957, 0.0
    %967 = vadd.xlane.f32.xlu0 %v966
    %v968 = vpop.xlane.xlu0 %967
    %v969 = vsel %vm84, %v959, 0.0
    %970 = vadd.xlane.f32.xlu0 %v969
    %v971 = vpop.xlane.xlu0 %970
    %v972 = vrcp.pop %v962
    %v973 = vmul.f32 %v962, %v972
    %v974 = vsub.f32 1.0, %v973
    %v975 = vmul.f32 %v972, %v974
    %v976 = vadd.f32 %v972, %v975
    %vm977 = vweird.f32 %v962
    %vm978 = vweird.f32 %v972
    %vm979 = vmor %vm977, %vm978
    %v980 = vsel %vm979, %v972, %v976
    %v981 = vand.u32 2147483647, %v962
    %vm982 = vcmp.eq.f32.partialorder %v981, 8.507059e+37
    %v983 = vand.u32 %v962, 2147483648
    %v984 = vor.u32 1.1754944e-38, %v983
    %v985 = vsel %vm982, %v984, %v980
    %v986 = vmul.f32 %v953, %v985
    %v987 = vrcp.pop %v965
    %v988 = vmul.f32 %v965, %v987
    %v989 = vsub.f32 1.0, %v988
    %v990 = vmul.f32 %v987, %v989
    %v991 = vadd.f32 %v987, %v990
    %vm992 = vweird.f32 %v965
    %vm993 = vweird.f32 %v987
    %vm994 = vmor %vm992, %vm993
    %v995 = vsel %vm994, %v987, %v991
    %v996 = vand.u32 2147483647, %v965
    %vm997 = vcmp.eq.f32.partialorder %v996, 8.507059e+37
    %v998 = vand.u32 %v965, 2147483648
    %v999 = vor.u32 1.1754944e-38, %v998
    %v1000 = vsel %vm997, %v999, %v995
    %v1001 = vmul.f32 %v955, %v1000
    %v1002 = vrcp.pop %v968
    %v1003 = vmul.f32 %v968, %v1002
    %v1004 = vsub.f32 1.0, %v1003
    %v1005 = vmul.f32 %v1002, %v1004
    %v1006 = vadd.f32 %v1002, %v1005
    %vm1007 = vweird.f32 %v968
    %vm1008 = vweird.f32 %v1002
    %vm1009 = vmor %vm1007, %vm1008
    %v1010 = vsel %vm1009, %v1002, %v1006
    %v1011 = vand.u32 2147483647, %v968
    %vm1012 = vcmp.eq.f32.partialorder %v1011, 8.507059e+37
    %v1013 = vand.u32 %v968, 2147483648
    %v1014 = vor.u32 1.1754944e-38, %v1013
    %v1015 = vsel %vm1012, %v1014, %v1010
    %v1016 = vmul.f32 %v957, %v1015
    %v1017 = vrcp.pop %v971
    %v1018 = vmul.f32 %v971, %v1017
    %v1019 = vsub.f32 1.0, %v1018
    %v1020 = vmul.f32 %v1017, %v1019
    %v1021 = vadd.f32 %v1017, %v1020
    %vm1022 = vweird.f32 %v971
    %vm1023 = vweird.f32 %v1017
    %vm1024 = vmor %vm1022, %vm1023
    %v1025 = vsel %vm1024, %v1017, %v1021
    %v1026 = vand.u32 2147483647, %v971
    %vm1027 = vcmp.eq.f32.partialorder %v1026, 8.507059e+37
    %v1028 = vand.u32 %v971, 2147483648
    %v1029 = vor.u32 1.1754944e-38, %v1028
    %v1030 = vsel %vm1027, %v1029, %v1025
    %v1031 = vmul.f32 %v959, %v1030
    %1032 = vrot.lane.b32.xlu0 %v233, 40
    %v1033 = vpop.permute.xlu0 %1032
    %1034 = vrot.lane.b32.xlu0 %v236, 40
    %v1035 = vpop.permute.xlu0 %1034
    %1036 = vrot.lane.b32.xlu0 %v239, 40
    %v1037 = vpop.permute.xlu0 %1036
    %1038 = vrot.lane.b32.xlu0 %v242, 40
    %v1039 = vpop.permute.xlu0 %1038
    %v1045 = vsel %vm84, %v986, 0
    %v1048 = vsel %vm84, %v1001, 0
    %v1051 = vsel %vm84, %v1016, 0
    %v1054 = vsel %vm84, %v1031, 0
    %1056 = vmatpush.msra.mxu0 0.0
    %1057 = vmatpush.msra.mxu0 0.0
    %1058 = vmatpush.msra.mxu0 0.0
    %1059 = vmatpush.msra.mxu0 0.0
    %1060 = vmatpush.msra.mxu0 0.0
    %1061 = vmatpush.msra.mxu0 0.0
    %1062 = vmatpush.msra.mxu0 0.0
    %1063 = vmatpush.msra.mxu0 0.0
    %1064 = vmatpush.msra.mxu0 0.0
    %1065 = vmatpush.msra.mxu0 0.0
    %1066 = vmatpush.msra.mxu0 0.0
    %1067 = vmatpush.msra.mxu0 0.0
    %1068 = vmatpush.msra.mxu0 %v1039
    %1069 = vmatpush.msra.mxu0 %v1037
    %1070 = vmatpush.msra.mxu0 %v1035
    %1071 = vmatpush.msra.mxu0 %v1033
    %1072 = vmatmul.f32.gmra.mxu0 %v1045
    %v1073 = vpop.f32.mrf.mxu0
    %v1074 = vadd.f32 0.0, %v1073
    %1075 = vmatmul.f32.gmra.mxu0 %v1048
    %v1076 = vpop.f32.mrf.mxu0
    %v1077 = vadd.f32 0.0, %v1076
    %1078 = vmatmul.f32.gmra.mxu0 %v1051
    %v1079 = vpop.f32.mrf.mxu0
    %v1080 = vadd.f32 0.0, %v1079
    %1081 = vmatmul.f32.gmra.mxu0 %v1054
    %v1082 = vpop.f32.mrf.mxu0
    %v1083 = vadd.f32 0.0, %v1082
    %1084 = vdwg.mxu0
    %1089 = vrot.lane.b32.xlu0 %v654, 8
    %v1090 = vpop.permute.xlu0 %1089
    %1091 = vrot.lane.b32.xlu0 %v657, 8
    %v1092 = vpop.permute.xlu0 %1091
    %1093 = vrot.lane.b32.xlu0 %v660, 8
    %v1094 = vpop.permute.xlu0 %1093
    %1095 = vrot.lane.b32.xlu0 %v663, 8
    %v1096 = vpop.permute.xlu0 %1095
    %1105 = vrot.lane.b32.xlu0 %v864, 16
    %v1106 = vpop.permute.xlu0 %1105
    %1107 = vrot.lane.b32.xlu0 %v867, 16
    %v1108 = vpop.permute.xlu0 %1107
    %1109 = vrot.lane.b32.xlu0 %v870, 16
    %v1110 = vpop.permute.xlu0 %1109
    %1111 = vrot.lane.b32.xlu0 %v873, 16
    %v1112 = vpop.permute.xlu0 %1111
    %1121 = vrot.lane.b32.xlu0 %v1074, 24
    %v1122 = vpop.permute.xlu0 %1121
    %1123 = vrot.lane.b32.xlu0 %v1077, 24
    %v1124 = vpop.permute.xlu0 %1123
    %1125 = vrot.lane.b32.xlu0 %v1080, 24
    %v1126 = vpop.permute.xlu0 %1125
    %1127 = vrot.lane.b32.xlu0 %v1083, 24
    %v1128 = vpop.permute.xlu0 %1127
    %v1133 = vsel %vm260, %v444, %v1090
    %v1134 = vsel %vm260, %v447, %v1092
    %v1135 = vsel %vm260, %v450, %v1094
    %v1136 = vsel %vm260, %v453, %v1096
    %vm1137 = vcmask 130048
    %v1138 = vsel %vm1137, %v1133, %v1106
    %v1139 = vsel %vm1137, %v1134, %v1108
    %v1140 = vsel %vm1137, %v1135, %v1110
    %v1141 = vsel %vm1137, %v1136, %v1112
    %vm1142 = vcmask 195584
    %v1143 = vsel %vm1142, %v1138, %v1122
    %v1144 = vsel %vm1142, %v1139, %v1124
    %v1145 = vsel %vm1142, %v1140, %v1126
    %v1146 = vsel %vm1142, %v1141, %v1128
    %v1147 = vld [vmem:[%s2] sm:$0xff]
    %v1148 = vld [vmem:[%s2 + $0x8] sm:$0xff]
    %v1149 = vld [vmem:[%s2 + $0x10] sm:$0xff]
    %v1150 = vld [vmem:[%s2 + $0x18] sm:$0xff]
    %v1151 = vperm.slane %v79, 0
    %v1153 = vsel %vm84, %v1143, 0
    %v1156 = vsel %vm84, %v1144, 0
    %v1159 = vsel %vm84, %v1145, 0
    %v1162 = vsel %vm84, %v1146, 0
    %1164 = vmatpush.msra.mxu0 0.0
    %1165 = vmatpush.msra.mxu0 0.0
    %1166 = vmatpush.msra.mxu0 0.0
    %1167 = vmatpush.msra.mxu0 0.0
    %1168 = vmatpush.msra.mxu0 0.0
    %1169 = vmatpush.msra.mxu0 0.0
    %1170 = vmatpush.msra.mxu0 0.0
    %1171 = vmatpush.msra.mxu0 0.0
    %1172 = vmatpush.msra.mxu0 0.0
    %1173 = vmatpush.msra.mxu0 0.0
    %1174 = vmatpush.msra.mxu0 0.0
    %1175 = vmatpush.msra.mxu0 0.0
    %1176 = vmatpush.msra.mxu0 %v1150
    %1177 = vmatpush.msra.mxu0 %v1149
    %1178 = vmatpush.msra.mxu0 %v1148
    %1179 = vmatpush.msra.mxu0 %v1147
    %1180 = vmatmul.f32.gmra.mxu0 %v1153
    %v1181 = vpop.f32.mrf.mxu0
    %v1182 = vadd.f32 %v1151, %v1181
    %1183 = vmatmul.f32.gmra.mxu0 %v1156
    %v1184 = vpop.f32.mrf.mxu0
    %v1185 = vadd.f32 %v1151, %v1184
    %1186 = vmatmul.f32.gmra.mxu0 %v1159
    %v1187 = vpop.f32.mrf.mxu0
    %v1188 = vadd.f32 %v1151, %v1187
    %1189 = vmatmul.f32.gmra.mxu0 %v1162
    %v1190 = vpop.f32.mrf.mxu0
    %v1191 = vadd.f32 %v1151, %v1190
    %1192 = vdwg.mxu0
    %v1193 = vadd.f32 %v72, %v1182
    %v1194 = vadd.f32 %v73, %v1185
    %v1195 = vadd.f32 %v74, %v1188
    %v1196 = vadd.f32 %v75, %v1191
    %v1197 = vsel %vm84, %v1193, 0.0
    %1198 = vadd.xlane.f32.xlu0 %v1197
    %v1199 = vpop.xlane.xlu0 %1198
    %v1200 = vsel %vm84, %v1194, 0.0
    %1201 = vadd.xlane.f32.xlu0 %v1200
    %v1202 = vpop.xlane.xlu0 %1201
    %v1203 = vsel %vm84, %v1195, 0.0
    %1204 = vadd.xlane.f32.xlu0 %v1203
    %v1205 = vpop.xlane.xlu0 %1204
    %v1206 = vsel %vm84, %v1196, 0.0
    %1207 = vadd.xlane.f32.xlu0 %v1206
    %v1208 = vpop.xlane.xlu0 %1207
    %v1209 = vmul.f32 %v1199, %v103
    %v1210 = vmul.f32 %v1202, %v103
    %v1211 = vmul.f32 %v1205, %v103
    %v1212 = vmul.f32 %v1208, %v103
    %v1213 = vmul.f32 %v1193, %v1193
    %v1214 = vmul.f32 %v1194, %v1194
    %v1215 = vmul.f32 %v1195, %v1195
    %v1216 = vmul.f32 %v1196, %v1196
    %v1217 = vsel %vm84, %v1213, 0.0
    %1218 = vadd.xlane.f32.xlu0 %v1217
    %v1219 = vpop.xlane.xlu0 %1218
    %v1220 = vsel %vm84, %v1214, 0.0
    %1221 = vadd.xlane.f32.xlu0 %v1220
    %v1222 = vpop.xlane.xlu0 %1221
    %v1223 = vsel %vm84, %v1215, 0.0
    %1224 = vadd.xlane.f32.xlu0 %v1223
    %v1225 = vpop.xlane.xlu0 %1224
    %v1226 = vsel %vm84, %v1216, 0.0
    %1227 = vadd.xlane.f32.xlu0 %v1226
    %v1228 = vpop.xlane.xlu0 %1227
    %v1229 = vmul.f32 %v1219, %v103
    %v1230 = vmul.f32 %v1222, %v103
    %v1231 = vmul.f32 %v1225, %v103
    %v1232 = vmul.f32 %v1228, %v103
    %v1233 = vmul.f32 %v1209, %v1209
    %v1234 = vmul.f32 %v1210, %v1210
    %v1235 = vmul.f32 %v1211, %v1211
    %v1236 = vmul.f32 %v1212, %v1212
    %v1237 = vsub.f32 %v1229, %v1233
    %v1238 = vsub.f32 %v1230, %v1234
    %v1239 = vsub.f32 %v1231, %v1235
    %v1240 = vsub.f32 %v1232, %v1236
    %v1241 = vsub.f32 %v1193, %v1209
    %v1242 = vsub.f32 %v1194, %v1210
    %v1243 = vsub.f32 %v1195, %v1211
    %v1244 = vsub.f32 %v1196, %v1212
    %v1245 = vadd.f32 %v1237, 1e-05
    %v1246 = vadd.f32 %v1238, 1e-05
    %v1247 = vadd.f32 %v1239, 1e-05
    %v1248 = vadd.f32 %v1240, 1e-05
    %v1249 = vrsqrt.pop %v1245
    %v1250 = vmul.f32 %v1249, %v1245
    %v1251 = vmul.f32 %v1250, %v1249
    %v1252 = vmul.f32 0.5, %v1251
    %v1253 = vsub.f32 1.5, %v1252
    %v1254 = vmul.f32 %v1249, %v1253
    %vm1255 = vweird.f32 %v1245
    %vm1256 = vweird.f32 %v1249
    %vm1257 = vmor %vm1255, %vm1256
    %v1258 = vsel %vm1257, %v1249, %v1254
    %v1259 = vrsqrt.pop %v1246
    %v1260 = vmul.f32 %v1259, %v1246
    %v1261 = vmul.f32 %v1260, %v1259
    %v1262 = vmul.f32 0.5, %v1261
    %v1263 = vsub.f32 1.5, %v1262
    %v1264 = vmul.f32 %v1259, %v1263
    %vm1265 = vweird.f32 %v1246
    %vm1266 = vweird.f32 %v1259
    %vm1267 = vmor %vm1265, %vm1266
    %v1268 = vsel %vm1267, %v1259, %v1264
    %v1269 = vrsqrt.pop %v1247
    %v1270 = vmul.f32 %v1269, %v1247
    %v1271 = vmul.f32 %v1270, %v1269
    %v1272 = vmul.f32 0.5, %v1271
    %v1273 = vsub.f32 1.5, %v1272
    %v1274 = vmul.f32 %v1269, %v1273
    %vm1275 = vweird.f32 %v1247
    %vm1276 = vweird.f32 %v1269
    %vm1277 = vmor %vm1275, %vm1276
    %v1278 = vsel %vm1277, %v1269, %v1274
    %v1279 = vrsqrt.pop %v1248
    %v1280 = vmul.f32 %v1279, %v1248
    %v1281 = vmul.f32 %v1280, %v1279
    %v1282 = vmul.f32 0.5, %v1281
    %v1283 = vsub.f32 1.5, %v1282
    %v1284 = vmul.f32 %v1279, %v1283
    %vm1285 = vweird.f32 %v1248
    %vm1286 = vweird.f32 %v1279
    %vm1287 = vmor %vm1285, %vm1286
    %v1288 = vsel %vm1287, %v1279, %v1284
    %v1289 = vmul.f32 %v1241, %v1258
    %v1290 = vmul.f32 %v1242, %v1268
    %v1291 = vmul.f32 %v1243, %v1278
    %v1292 = vmul.f32 %v1244, %v1288
    %v1293 = vperm.slane %v80, 0
    %v1294 = vmul.f32 %v1289, %v1293
    %v1295 = vmul.f32 %v1290, %v1293
    %v1296 = vmul.f32 %v1291, %v1293
    %v1297 = vmul.f32 %v1292, %v1293
    %v1298 = vperm.slane %v81, 0
    %v1299 = vadd.f32 %v1294, %v1298
    %v1300 = vadd.f32 %v1295, %v1298
    %v1301 = vadd.f32 %v1296, %v1298
    %v1302 = vadd.f32 %v1297, %v1298
    %v1303 = vld [vmem:[#allocation2] sm:$0xff]
    %v1304 = vld [vmem:[#allocation2 + $0x8] sm:$0xff]
    %v1305 = vld [vmem:[#allocation2 + $0x10] sm:$0xff]
    %v1306 = vld [vmem:[#allocation2 + $0x18] sm:$0xff]
    %v1307 = vperm.slane %v82, 0
    %v1309 = vsel %vm84, %v1299, 0
    %v1312 = vsel %vm84, %v1300, 0
    %v1315 = vsel %vm84, %v1301, 0
    %v1318 = vsel %vm84, %v1302, 0
    %1320 = vmatpush.msra.mxu0 0.0
    %1321 = vmatpush.msra.mxu0 0.0
    %1322 = vmatpush.msra.mxu0 0.0
    %1323 = vmatpush.msra.mxu0 0.0
    %1324 = vmatpush.msra.mxu0 0.0
    %1325 = vmatpush.msra.mxu0 0.0
    %1326 = vmatpush.msra.mxu0 0.0
    %1327 = vmatpush.msra.mxu0 0.0
    %1328 = vmatpush.msra.mxu0 0.0
    %1329 = vmatpush.msra.mxu0 0.0
    %1330 = vmatpush.msra.mxu0 0.0
    %1331 = vmatpush.msra.mxu0 0.0
    %1332 = vmatpush.msra.mxu0 %v1306
    %1333 = vmatpush.msra.mxu0 %v1305
    %1334 = vmatpush.msra.mxu0 %v1304
    %1335 = vmatpush.msra.mxu0 %v1303
    %1336 = vmatmul.f32.gmra.mxu0 %v1309
    %v1337 = vpop.f32.mrf.mxu0
    %v1338 = vadd.f32 %v1307, %v1337
    %1339 = vmatmul.f32.gmra.mxu0 %v1312
    %v1340 = vpop.f32.mrf.mxu0
    %v1341 = vadd.f32 %v1307, %v1340
    %1342 = vmatmul.f32.gmra.mxu0 %v1315
    %v1343 = vpop.f32.mrf.mxu0
    %v1344 = vadd.f32 %v1307, %v1343
    %1345 = vmatmul.f32.gmra.mxu0 %v1318
    %v1346 = vpop.f32.mrf.mxu0
    %v1347 = vadd.f32 %v1307, %v1346
    %1348 = vdwg.mxu0
    %v1349 = vxor.u32 %v1338, 2147483648
    %v1350 = vxor.u32 %v1341, 2147483648
    %v1351 = vxor.u32 %v1344, 2147483648
    %v1352 = vxor.u32 %v1347, 2147483648
    %v1353 = vmul.f32 %v1349, 1.442695
    %v1354 = vpow.pop %v1353
    %v1355 = vmul.f32 %v1350, 1.442695
    %v1356 = vpow.pop %v1355
    %v1357 = vmul.f32 %v1351, 1.442695
    %v1358 = vpow.pop %v1357
    %v1359 = vmul.f32 %v1352, 1.442695
    %v1360 = vpow.pop %v1359
    %v1361 = vadd.f32 %v1354, 1.0
    %v1362 = vadd.f32 %v1356, 1.0
    %v1363 = vadd.f32 %v1358, 1.0
    %v1364 = vadd.f32 %v1360, 1.0
    %v1365 = vrcp.pop %v1361
    %v1366 = vmul.f32 %v1361, %v1365
    %v1367 = vsub.f32 1.0, %v1366
    %v1368 = vmul.f32 %v1365, %v1367
    %v1369 = vadd.f32 %v1365, %v1368
    %vm1370 = vweird.f32 %v1361
    %vm1371 = vweird.f32 %v1365
    %vm1372 = vmor %vm1370, %vm1371
    %v1373 = vsel %vm1372, %v1365, %v1369
    %v1374 = vand.u32 2147483647, %v1361
    %vm1375 = vcmp.eq.f32.partialorder %v1374, 8.507059e+37
    %v1376 = vand.u32 %v1361, 2147483648
    %v1377 = vor.u32 1.1754944e-38, %v1376
    %v1378 = vsel %vm1375, %v1377, %v1373
    %v1379 = vmul.f32 1.0, %v1378
    %v1380 = vrcp.pop %v1362
    %v1381 = vmul.f32 %v1362, %v1380
    %v1382 = vsub.f32 1.0, %v1381
    %v1383 = vmul.f32 %v1380, %v1382
    %v1384 = vadd.f32 %v1380, %v1383
    %vm1385 = vweird.f32 %v1362
    %vm1386 = vweird.f32 %v1380
    %vm1387 = vmor %vm1385, %vm1386
    %v1388 = vsel %vm1387, %v1380, %v1384
    %v1389 = vand.u32 2147483647, %v1362
    %vm1390 = vcmp.eq.f32.partialorder %v1389, 8.507059e+37
    %v1391 = vand.u32 %v1362, 2147483648
    %v1392 = vor.u32 1.1754944e-38, %v1391
    %v1393 = vsel %vm1390, %v1392, %v1388
    %v1394 = vmul.f32 1.0, %v1393
    %v1395 = vrcp.pop %v1363
    %v1396 = vmul.f32 %v1363, %v1395
    %v1397 = vsub.f32 1.0, %v1396
    %v1398 = vmul.f32 %v1395, %v1397
    %v1399 = vadd.f32 %v1395, %v1398
    %vm1400 = vweird.f32 %v1363
    %vm1401 = vweird.f32 %v1395
    %vm1402 = vmor %vm1400, %vm1401
    %v1403 = vsel %vm1402, %v1395, %v1399
    %v1404 = vand.u32 2147483647, %v1363
    %vm1405 = vcmp.eq.f32.partialorder %v1404, 8.507059e+37
    %v1406 = vand.u32 %v1363, 2147483648
    %v1407 = vor.u32 1.1754944e-38, %v1406
    %v1408 = vsel %vm1405, %v1407, %v1403
    %v1409 = vmul.f32 1.0, %v1408
    %v1410 = vrcp.pop %v1364
    %v1411 = vmul.f32 %v1364, %v1410
    %v1412 = vsub.f32 1.0, %v1411
    %v1413 = vmul.f32 %v1410, %v1412
    %v1414 = vadd.f32 %v1410, %v1413
    %vm1415 = vweird.f32 %v1364
    %vm1416 = vweird.f32 %v1410
    %vm1417 = vmor %vm1415, %vm1416
    %v1418 = vsel %vm1417, %v1410, %v1414
    %v1419 = vand.u32 2147483647, %v1364
    %vm1420 = vcmp.eq.f32.partialorder %v1419, 8.507059e+37
    %v1421 = vand.u32 %v1364, 2147483648
    %v1422 = vor.u32 1.1754944e-38, %v1421
    %v1423 = vsel %vm1420, %v1422, %v1418
    %v1424 = vmul.f32 1.0, %v1423
    %v1425 = vmul.f32 %v1338, %v1379
    %v1426 = vmul.f32 %v1341, %v1394
    %v1427 = vmul.f32 %v1344, %v1409
    %v1428 = vmul.f32 %v1347, %v1424
    %v1429 = vld [vmem:[%s4] sm:$0xff]
    %v1430 = vld [vmem:[%s4 + $0x8] sm:$0xff]
    %v1431 = vld [vmem:[%s4 + $0x10] sm:$0xff]
    %v1432 = vld [vmem:[%s4 + $0x18] sm:$0xff]
    %v1433 = vld [vmem:[%s4 + $0x20] sm:$0xff]
    %v1434 = vld [vmem:[%s4 + $0x28] sm:$0xff]
    %v1435 = vld [vmem:[%s4 + $0x30] sm:$0xff]
    %v1436 = vld [vmem:[%s4 + $0x38] sm:$0xff]
    %v1437 = vperm.slane %v83, 0
    %vm1438 = vcmask 523264
    %v1440 = vsel %vm1438, %v1425, 0
    %v1443 = vsel %vm1438, %v1426, 0
    %v1446 = vsel %vm1438, %v1427, 0
    %v1449 = vsel %vm1438, %v1428, 0
    %1451 = vmatpush.msra.mxu0 0.0
    %1452 = vmatpush.msra.mxu0 0.0
    %1453 = vmatpush.msra.mxu0 0.0
    %1454 = vmatpush.msra.mxu0 0.0
    %1455 = vmatpush.msra.mxu0 0.0
    %1456 = vmatpush.msra.mxu0 0.0
    %1457 = vmatpush.msra.mxu0 0.0
    %1458 = vmatpush.msra.mxu0 0.0
    %1459 = vmatpush.msra.mxu0 %v1436
    %1460 = vmatpush.msra.mxu0 %v1435
    %1461 = vmatpush.msra.mxu0 %v1434
    %1462 = vmatpush.msra.mxu0 %v1433
    %1463 = vmatpush.msra.mxu0 %v1432
    %1464 = vmatpush.msra.mxu0 %v1431
    %1465 = vmatpush.msra.mxu0 %v1430
    %1466 = vmatpush.msra.mxu0 %v1429
    %1467 = vmatmul.f32.gmra.mxu0 %v1440
    %v1468 = vpop.f32.mrf.mxu0
    %v1469 = vadd.f32 %v1437, %v1468
    %1470 = vmatmul.f32.gmra.mxu0 %v1443
    %v1471 = vpop.f32.mrf.mxu0
    %v1472 = vadd.f32 %v1437, %v1471
    %1473 = vmatmul.f32.gmra.mxu0 %v1446
    %v1474 = vpop.f32.mrf.mxu0
    %v1475 = vadd.f32 %v1437, %v1474
    %1476 = vmatmul.f32.gmra.mxu0 %v1449
    %v1477 = vpop.f32.mrf.mxu0
    %v1478 = vadd.f32 %v1437, %v1477
    %1479 = vdwg.mxu0
    %v1480 = vadd.f32 %v1193, %v1469
    %v1481 = vadd.f32 %v1194, %v1472
    %v1482 = vadd.f32 %v1195, %v1475
    %v1483 = vadd.f32 %v1196, %v1478
    %1484 = vst.msk [vmem:[#allocation8] sm:$0xff] %vm84, %v1480
    %1485 = vst.msk [vmem:[#allocation8 + $0x8] sm:$0xff] %vm84, %v1481
    %1486 = vst.msk [vmem:[#allocation8 + $0x10] sm:$0xff] %vm84, %v1482
    %1487 = vst.msk [vmem:[#allocation8 + $0x18] sm:$0xff] %vm84, %v1483
    // Predicated region
    $region42: #{transformer_encoder_packed.1} parent=1 // pred_check
      _
    $region43: #{transformer_encoder_packed.1} parent=1 // pred_check_branch
      %1489 = sbr.rel (0) target = $region45
    $region44: #{transformer_encoder_packed.1} parent=1 // pred_region
      %1491 = vsyncadd [#allocation4], 0
      %s1492 = sshll.u32 [#allocation8], 4
      %s1493 = int_to_ptr.vmem [resolvable:$true] %s1492
      %s1494 = sshll.u32 %s7, 4
      %s1495 = int_to_ptr.hbm [resolvable:$true] %s1494
      %1500 = dma.vmem_to_hbm [thread:$0]  %s1493, 512, %s1495, [#allocation4], 128, 128, 8
    $region45: #{transformer_encoder_packed.1} parent=1 // pred_fallthru
      _
    // Predicated region
    $region46: #{transformer_encoder_packed.1} parent=1 // pred_check
      _
    $region47: #{transformer_encoder_packed.1} parent=1 // pred_check_branch
      %1502 = sbr.rel (0) target = $region49
    $region48: #{transformer_encoder_packed.1} parent=1 // pred_region
      %1504 = dma.done [#allocation4], 512
    $region49: #{transformer_encoder_packed.1} parent=1 // pred_fallthru
      _
    %1505 = vsyncpa [#allocation3], 1
    %1506 = vsyncpa [#allocation6], 1
    %1507 = vsyncpa [#allocation4], 1

</llo_original>
